<compile_context>
chip_gen: v5e
topology: v5e:2x2
jax: 0.10.0
libtpu: 0.0.40
codegen_flags: <defaults>
</compile_context>

<pallas_src>
import functools

import numpy as np
import jax
import jax.numpy as jnp
from jax.experimental import pallas as pl
from jax.experimental.pallas import tpu as pltpu

# Conv geometry is fixed by the module spec:
#   channels=[16, 32], kernel_sizes=[8, 5], strides=[4, 2], paddings=[0, 0].
K1, S1 = 8, 4     # conv1 kernel / stride
K2, ST2 = 5, 2    # conv2 kernel / stride

VMEM_SPEC = pl.BlockSpec(memory_space=pltpu.MemorySpace.VMEM)


# ------------------------------ Pallas kernel -------------------------------

def _race_fused_kernel(p_ref, w1_ref, b1_ref, w2_ref, b2_ref,
                       wfc_ref, bfc_ref, wh_ref, bh_ref,
                       pi_ref, v_ref, *, n, npos, kk, c1):
    """Whole RaceBasisModel forward on VMEM-resident blocks.

    p_ref : [(kk*npos*n), K1dim] bf16 conv1 patches, rows ordered (kk, s, n).
    w1_ref: [K1dim, c1] f32 (1/255 folded).   w2_ref: [(kk*c1), c2] f32.
    wfc_ref: [c2, fc].  wh_ref: [fc, A+1] (pi head + value column fused).
    """
    # conv1: one MXU dot over every (kernel-pos, conv2-pos, sample) patch row.
    # bf16 -> f32 cast happens in VMEM (VPU); patches are exact integers 0..255.
    p = p_ref[...].astype(jnp.float32)
    h1 = jnp.maximum(
        jnp.dot(p, w1_ref[...], preferred_element_type=jnp.float32)
        + b1_ref[...], 0.0)                                  # [(kk*npos*n), c1]

    # conv2 = sum over the kk kernel positions of contiguous row-blocks of h1
    # against the matching contiguous row-blocks of w2 (all offsets static,
    # sublane-aligned: multiples of npos*n / c1).
    sn = npos * n
    c2 = w2_ref.shape[-1]
    acc = jnp.zeros((sn, c2), jnp.float32)
    for k in range(kk):
        acc = acc + jnp.dot(h1[k * sn:(k + 1) * sn, :],
                            w2_ref[k * c1:(k + 1) * c1, :],
                            preferred_element_type=jnp.float32)
    h2 = jnp.maximum(acc + b2_ref[...], 0.0)                 # [npos*n, c2], (s, n)

    # global average pool: rows are spatial-major, so the mean over the npos
    # conv2 positions is a sum of npos contiguous [n, c2] row-blocks.
    feat = h2[0:n, :]
    for s in range(1, npos):
        feat = feat + h2[s * n:(s + 1) * n, :]
    feat = feat * (1.0 / npos)                               # [n, c2]

    # hidden FC + fused pi/value heads (value head = last column of wh).
    fc = jnp.maximum(
        jnp.dot(feat, wfc_ref[...], preferred_element_type=jnp.float32)
        + bfc_ref[...], 0.0)                                 # [n, fc]
    z = jnp.dot(fc, wh_ref[...],
                preferred_element_type=jnp.float32) + bh_ref[...]   # [n, A+1]

    a = pi_ref.shape[-1]
    logits = z[:, :a]
    m = jnp.max(logits, axis=-1, keepdims=True)
    e = jnp.exp(logits - m)
    pi_ref[...] = e / jnp.sum(e, axis=-1, keepdims=True)     # exact softmax
    v_ref[...] = z[:, a:a + 1]


def pallas_race_fused(patches, pp, n, npos):
    c1 = pp['w1m'].shape[1]
    kk = pp['w2m'].shape[0] // c1
    num_actions = pp['wh'].shape[1] - 1
    kernel = functools.partial(_race_fused_kernel, n=n, npos=npos, kk=kk, c1=c1)
    return pl.pallas_call(
        kernel,
        out_shape=(jax.ShapeDtypeStruct((n, num_actions), jnp.float32),
                   jax.ShapeDtypeStruct((n, 1), jnp.float32)),
        in_specs=[VMEM_SPEC] * 9,
        out_specs=(VMEM_SPEC, VMEM_SPEC),
        compiler_params=pltpu.CompilerParams(
            vmem_limit_bytes=32 * 1024 * 1024),
    )(patches, pp['w1m'], pp['b1r'], pp['w2m'], pp['b2r'],
      pp['wfct'], pp['bfcr'], pp['wh'], pp['bhr'])


# ----------------------- one-time weight preprocessing ----------------------

def prepare_params(params):
    """Hoisted out of the jitted forward (review item: per-call weight prep)."""
    c1 = params['w1'].shape[0]
    c2 = params['w2'].shape[0]
    return {
        # [C*K1*K1, c1], column order (c, kh1, kw1); 1/255 folded into w1.
        'w1m': params['w1'].reshape(c1, -1).T * (1.0 / 255.0),
        'b1r': params['b1'].reshape(1, c1),
        # [(kh*K2+kw)*c1 + c1_idx, c2]: matches the kernel's contiguous blocks.
        'w2m': params['w2'].transpose(2, 3, 1, 0).reshape(-1, c2),
        'b2r': params['b2'].reshape(1, c2),
        'wfct': params['wfc'].T,                              # [c2, fc]
        'bfcr': params['bfc'].reshape(1, -1),
        # pi head + value head fused into one matrix -> single MXU dot.
        'wh': jnp.concatenate([params['wpi'].T, params['wv'].T], axis=1),
        'bhr': jnp.concatenate([params['bpi'], params['bv']]).reshape(1, -1),
    }


# ------------------------------- glue (JAX) ---------------------------------

def _composed_patches(x):
    """x: [N, C, H, W] (stays uint8).  conv1 im2col patches gathered per conv2
    window; rows ordered (conv2-kernel-pos, conv2-spatial-pos, sample), columns
    ordered (c, kh1, kw1) to match w1m."""
    n, c, h, w = x.shape
    oh1 = (h - K1) // S1 + 1
    ow1 = (w - K1) // S1 + 1
    oh2 = (oh1 - K2) // ST2 + 1
    ow2 = (ow1 - K2) // ST2 + 1
    cols = []
    for i in range(K1):
        for j in range(K1):
            cols.append(x[:, :, i:i + S1 * oh1:S1, j:j + S1 * ow1:S1])
    pat = jnp.stack(cols, axis=2)                        # [n, c, K1*K1, oh1, ow1]
    pat = pat.transpose(0, 3, 4, 1, 2).reshape(n, oh1, ow1, c * K1 * K1)
    blocks = []
    for kh in range(K2):
        for kw in range(K2):
            wnd = pat[:, kh:kh + ST2 * oh2:ST2, kw:kw + ST2 * ow2:ST2, :]
            blocks.append(wnd.transpose(1, 2, 0, 3).reshape(oh2 * ow2 * n, -1))
    return jnp.concatenate(blocks, axis=0), oh2 * ow2    # [(K2*K2*npos*n), CK1K1]


def race_ff_forward(prepped, image, prev_action=None, prev_reward=None):
    """Same semantics as RaceBasisModel.forward: leading dims [T,B], [B] or []."""
    lead_shape = image.shape[:-3]
    c, h, w = image.shape[-3:]
    n = int(np.prod(lead_shape)) if lead_shape else 1
    x = image.reshape(n, c, h, w)                 # image stays uint8 through the gather
    patches, npos = _composed_patches(x)
    # bf16 is exact for integer pixel values 0..255; halves the kernel HBM read
    # vs the previous f32 patch stream.  TODO(synk): pass uint8 straight through.
    patches = patches.astype(jnp.bfloat16)
    pi, v = pallas_race_fused(patches, prepped, n, npos)
    num_actions = pi.shape[-1]
    return pi.reshape(lead_shape + (num_actions,)), v.reshape(lead_shape)


def init_params(key, image_shape=(4, 32, 32), output_size=6, fc_size=512):
    C = image_shape[0]

    def unif(k, shape, fan_in):
        bound = 1.0 / float(np.sqrt(fan_in))
        return jax.random.uniform(k, shape, jnp.float32, -bound, bound)

    ks = jax.random.split(key, 10)
    return {
        'w1': unif(ks[0], (16, C, 8, 8), C * 8 * 8),
        'b1': unif(ks[1], (16,), C * 8 * 8),
        'w2': unif(ks[2], (32, 16, 5, 5), 16 * 5 * 5),
        'b2': unif(ks[3], (32,), 16 * 5 * 5),
        'wfc': unif(ks[4], (fc_size, 32), 32),
        'bfc': unif(ks[5], (fc_size,), 32),
        'wpi': unif(ks[6], (output_size, fc_size), fc_size),
        'bpi': unif(ks[7], (output_size,), fc_size),
        'wv': unif(ks[8], (1, fc_size), fc_size),
        'bv': unif(ks[9], (1,), fc_size),
    }


def reference_forward(params, image):
    """Pure-JAX reference (lax.conv) for correctness checking."""
    img = image.astype(jnp.float32) / 255.0
    lead_shape = img.shape[:-3]
    N = int(np.prod(lead_shape)) if lead_shape else 1
    x = img.reshape((N,) + img.shape[-3:])
    dn = ('NCHW', 'OIHW', 'NCHW')
    y = jax.lax.conv_general_dilated(x, params['w1'], (4, 4), 'VALID',
                                     dimension_numbers=dn)
    y = jnp.maximum(y + params['b1'][None, :, None, None], 0.0)
    y = jax.lax.conv_general_dilated(y, params['w2'], (2, 2), 'VALID',
                                     dimension_numbers=dn)
    y = jnp.maximum(y + params['b2'][None, :, None, None], 0.0)
    feat = jnp.mean(y, axis=(2, 3))
    h = jnp.maximum(feat @ params['wfc'].T + params['bfc'], 0.0)
    pi = jax.nn.softmax(h @ params['wpi'].T + params['bpi'], axis=-1)
    v = (h @ params['wv'].T + params['bv'])[..., 0]
    return pi.reshape(lead_shape + (pi.shape[-1],)), v.reshape(lead_shape)


# ---------------------------------- main -------------------------------------

if __name__ == "__main__":
    key = jax.random.PRNGKey(0)
    kp, ki = jax.random.split(key)

    image_shape = (4, 32, 32)      # (C, H, W): 32x32 so the conv geometry is valid
    output_size = 6
    T, B = 2, 2

    params = init_params(kp, image_shape, output_size)
    prepped = prepare_params(params)           # one-time, outside the jitted path

    image = jax.random.randint(ki, (T, B) + image_shape, 0, 256,
                               dtype=jnp.int32).astype(jnp.uint8)
    prev_action = jnp.zeros((T, B), jnp.int32)     # unused, as in the module
    prev_reward = jnp.zeros((T, B), jnp.float32)   # unused, as in the module

    fwd = jax.jit(race_ff_forward)
    pi, v = fwd(prepped, image, prev_action, prev_reward)
    jax.block_until_ready((pi, v))

    assert pi.shape == (T, B, output_size) and v.shape == (T, B)
    pi_ref, v_ref = reference_forward(params, image)
    # exact softmax reciprocal + exact bf16 pixel values -> tight tolerances
    np.testing.assert_allclose(np.asarray(pi), np.asarray(pi_ref),
                               rtol=1e-4, atol=1e-5)
    np.testing.assert_allclose(np.asarray(v), np.asarray(v_ref),
                               rtol=1e-4, atol=1e-4)

    print("KERNEL_OK")
</pallas_src>

<mosaic_0001>
module attributes {stable_mosaic.version = 11 : i64} {
  func.func @_race_fused_kernel(%arg0: memref<400x256xbf16, #tpu.memory_space<vmem>>, %arg1: memref<256x16xf32, #tpu.memory_space<vmem>>, %arg2: memref<1x16xf32, #tpu.memory_space<vmem>>, %arg3: memref<400x32xf32, #tpu.memory_space<vmem>>, %arg4: memref<1x32xf32, #tpu.memory_space<vmem>>, %arg5: memref<32x512xf32, #tpu.memory_space<vmem>>, %arg6: memref<1x512xf32, #tpu.memory_space<vmem>>, %arg7: memref<512x7xf32, #tpu.memory_space<vmem>>, %arg8: memref<1x7xf32, #tpu.memory_space<vmem>>, %arg9: memref<4x6xf32, #tpu.memory_space<vmem>>, %arg10: memref<4x1xf32, #tpu.memory_space<vmem>>) attributes {dimension_semantics = [], scalar_prefetch = 0 : i64, scratch_operands = 0 : i64, tpu.core_type = #tpu.core_type<tc>} {
    %c0 = arith.constant 0 : index
    %c0_0 = arith.constant 0 : index
    %0 = vector.load %arg0[%c0, %c0_0] : memref<400x256xbf16, #tpu.memory_space<vmem>>, vector<400x256xbf16>
    %1 = arith.extf %0 : vector<400x256xbf16> to vector<400x256xf32>
    %c0_1 = arith.constant 0 : index
    %c0_2 = arith.constant 0 : index
    %2 = vector.load %arg1[%c0_1, %c0_2] : memref<256x16xf32, #tpu.memory_space<vmem>>, vector<256x16xf32>
    %cst = arith.constant dense<0.000000e+00> : vector<400x16xf32>
    %3 = tpu.matmul %1, %2, %cst {dimension_numbers = #tpu.dot_dimension_numbers<[1], [0], [0], [1], [0, 0, 1, 1], [], []>} : vector<400x256xf32>, vector<256x16xf32>, vector<400x16xf32> -> vector<400x16xf32>
    %c0_3 = arith.constant 0 : index
    %c0_4 = arith.constant 0 : index
    %4 = vector.load %arg2[%c0_3, %c0_4] : memref<1x16xf32, #tpu.memory_space<vmem>>, vector<1x16xf32>
    %5 = vector.broadcast %4 : vector<1x16xf32> to vector<400x16xf32>
    %6 = arith.addf %3, %5 : vector<400x16xf32>
    %cst_5 = arith.constant 0.000000e+00 : f32
    %7 = vector.broadcast %cst_5 : f32 to vector<400x16xf32>
    %8 = arith.maximumf %6, %7 : vector<400x16xf32>
    %cst_6 = arith.constant 0.000000e+00 : f32
    %9 = vector.broadcast %cst_6 : f32 to vector<16x32xf32>
    %10 = vector.extract_strided_slice %8 {offsets = [0, 0], sizes = [16, 16], strides = [1, 1]} : vector<400x16xf32> to vector<16x16xf32>
    %c0_7 = arith.constant 0 : index
    %c0_8 = arith.constant 0 : index
    %11 = vector.load %arg3[%c0_7, %c0_8] : memref<400x32xf32, #tpu.memory_space<vmem>>, vector<16x32xf32>
    %cst_9 = arith.constant dense<0.000000e+00> : vector<16x32xf32>
    %12 = tpu.matmul %10, %11, %cst_9 {dimension_numbers = #tpu.dot_dimension_numbers<[1], [0], [0], [1], [0, 0, 1, 1], [], []>} : vector<16x16xf32>, vector<16x32xf32>, vector<16x32xf32> -> vector<16x32xf32>
    %13 = arith.addf %9, %12 : vector<16x32xf32>
    %14 = vector.extract_strided_slice %8 {offsets = [16, 0], sizes = [16, 16], strides = [1, 1]} : vector<400x16xf32> to vector<16x16xf32>
    %c16 = arith.constant 16 : index
    %c0_10 = arith.constant 0 : index
    %15 = vector.load %arg3[%c16, %c0_10] : memref<400x32xf32, #tpu.memory_space<vmem>>, vector<16x32xf32>
    %cst_11 = arith.constant dense<0.000000e+00> : vector<16x32xf32>
    %16 = tpu.matmul %14, %15, %cst_11 {dimension_numbers = #tpu.dot_dimension_numbers<[1], [0], [0], [1], [0, 0, 1, 1], [], []>} : vector<16x16xf32>, vector<16x32xf32>, vector<16x32xf32> -> vector<16x32xf32>
    %17 = arith.addf %13, %16 : vector<16x32xf32>
    %18 = vector.extract_strided_slice %8 {offsets = [32, 0], sizes = [16, 16], strides = [1, 1]} : vector<400x16xf32> to vector<16x16xf32>
    %c32 = arith.constant 32 : index
    %c0_12 = arith.constant 0 : index
    %19 = vector.load %arg3[%c32, %c0_12] : memref<400x32xf32, #tpu.memory_space<vmem>>, vector<16x32xf32>
    %cst_13 = arith.constant dense<0.000000e+00> : vector<16x32xf32>
    %20 = tpu.matmul %18, %19, %cst_13 {dimension_numbers = #tpu.dot_dimension_numbers<[1], [0], [0], [1], [0, 0, 1, 1], [], []>} : vector<16x16xf32>, vector<16x32xf32>, vector<16x32xf32> -> vector<16x32xf32>
    %21 = arith.addf %17, %20 : vector<16x32xf32>
    %22 = vector.extract_strided_slice %8 {offsets = [48, 0], sizes = [16, 16], strides = [1, 1]} : vector<400x16xf32> to vector<16x16xf32>
    %c48 = arith.constant 48 : index
    %c0_14 = arith.constant 0 : index
    %23 = vector.load %arg3[%c48, %c0_14] : memref<400x32xf32, #tpu.memory_space<vmem>>, vector<16x32xf32>
    %cst_15 = arith.constant dense<0.000000e+00> : vector<16x32xf32>
    %24 = tpu.matmul %22, %23, %cst_15 {dimension_numbers = #tpu.dot_dimension_numbers<[1], [0], [0], [1], [0, 0, 1, 1], [], []>} : vector<16x16xf32>, vector<16x32xf32>, vector<16x32xf32> -> vector<16x32xf32>
    %25 = arith.addf %21, %24 : vector<16x32xf32>
    %26 = vector.extract_strided_slice %8 {offsets = [64, 0], sizes = [16, 16], strides = [1, 1]} : vector<400x16xf32> to vector<16x16xf32>
    %c64 = arith.constant 64 : index
    %c0_16 = arith.constant 0 : index
    %27 = vector.load %arg3[%c64, %c0_16] : memref<400x32xf32, #tpu.memory_space<vmem>>, vector<16x32xf32>
    %cst_17 = arith.constant dense<0.000000e+00> : vector<16x32xf32>
    %28 = tpu.matmul %26, %27, %cst_17 {dimension_numbers = #tpu.dot_dimension_numbers<[1], [0], [0], [1], [0, 0, 1, 1], [], []>} : vector<16x16xf32>, vector<16x32xf32>, vector<16x32xf32> -> vector<16x32xf32>
    %29 = arith.addf %25, %28 : vector<16x32xf32>
    %30 = vector.extract_strided_slice %8 {offsets = [80, 0], sizes = [16, 16], strides = [1, 1]} : vector<400x16xf32> to vector<16x16xf32>
    %c80 = arith.constant 80 : index
    %c0_18 = arith.constant 0 : index
    %31 = vector.load %arg3[%c80, %c0_18] : memref<400x32xf32, #tpu.memory_space<vmem>>, vector<16x32xf32>
    %cst_19 = arith.constant dense<0.000000e+00> : vector<16x32xf32>
    %32 = tpu.matmul %30, %31, %cst_19 {dimension_numbers = #tpu.dot_dimension_numbers<[1], [0], [0], [1], [0, 0, 1, 1], [], []>} : vector<16x16xf32>, vector<16x32xf32>, vector<16x32xf32> -> vector<16x32xf32>
    %33 = arith.addf %29, %32 : vector<16x32xf32>
    %34 = vector.extract_strided_slice %8 {offsets = [96, 0], sizes = [16, 16], strides = [1, 1]} : vector<400x16xf32> to vector<16x16xf32>
    %c96 = arith.constant 96 : index
    %c0_20 = arith.constant 0 : index
    %35 = vector.load %arg3[%c96, %c0_20] : memref<400x32xf32, #tpu.memory_space<vmem>>, vector<16x32xf32>
    %cst_21 = arith.constant dense<0.000000e+00> : vector<16x32xf32>
    %36 = tpu.matmul %34, %35, %cst_21 {dimension_numbers = #tpu.dot_dimension_numbers<[1], [0], [0], [1], [0, 0, 1, 1], [], []>} : vector<16x16xf32>, vector<16x32xf32>, vector<16x32xf32> -> vector<16x32xf32>
    %37 = arith.addf %33, %36 : vector<16x32xf32>
    %38 = vector.extract_strided_slice %8 {offsets = [112, 0], sizes = [16, 16], strides = [1, 1]} : vector<400x16xf32> to vector<16x16xf32>
    %c112 = arith.constant 112 : index
    %c0_22 = arith.constant 0 : index
    %39 = vector.load %arg3[%c112, %c0_22] : memref<400x32xf32, #tpu.memory_space<vmem>>, vector<16x32xf32>
    %cst_23 = arith.constant dense<0.000000e+00> : vector<16x32xf32>
    %40 = tpu.matmul %38, %39, %cst_23 {dimension_numbers = #tpu.dot_dimension_numbers<[1], [0], [0], [1], [0, 0, 1, 1], [], []>} : vector<16x16xf32>, vector<16x32xf32>, vector<16x32xf32> -> vector<16x32xf32>
    %41 = arith.addf %37, %40 : vector<16x32xf32>
    %42 = vector.extract_strided_slice %8 {offsets = [128, 0], sizes = [16, 16], strides = [1, 1]} : vector<400x16xf32> to vector<16x16xf32>
    %c128 = arith.constant 128 : index
    %c0_24 = arith.constant 0 : index
    %43 = vector.load %arg3[%c128, %c0_24] : memref<400x32xf32, #tpu.memory_space<vmem>>, vector<16x32xf32>
    %cst_25 = arith.constant dense<0.000000e+00> : vector<16x32xf32>
    %44 = tpu.matmul %42, %43, %cst_25 {dimension_numbers = #tpu.dot_dimension_numbers<[1], [0], [0], [1], [0, 0, 1, 1], [], []>} : vector<16x16xf32>, vector<16x32xf32>, vector<16x32xf32> -> vector<16x32xf32>
    %45 = arith.addf %41, %44 : vector<16x32xf32>
    %46 = vector.extract_strided_slice %8 {offsets = [144, 0], sizes = [16, 16], strides = [1, 1]} : vector<400x16xf32> to vector<16x16xf32>
    %c144 = arith.constant 144 : index
    %c0_26 = arith.constant 0 : index
    %47 = vector.load %arg3[%c144, %c0_26] : memref<400x32xf32, #tpu.memory_space<vmem>>, vector<16x32xf32>
    %cst_27 = arith.constant dense<0.000000e+00> : vector<16x32xf32>
    %48 = tpu.matmul %46, %47, %cst_27 {dimension_numbers = #tpu.dot_dimension_numbers<[1], [0], [0], [1], [0, 0, 1, 1], [], []>} : vector<16x16xf32>, vector<16x32xf32>, vector<16x32xf32> -> vector<16x32xf32>
    %49 = arith.addf %45, %48 : vector<16x32xf32>
    %50 = vector.extract_strided_slice %8 {offsets = [160, 0], sizes = [16, 16], strides = [1, 1]} : vector<400x16xf32> to vector<16x16xf32>
    %c160 = arith.constant 160 : index
    %c0_28 = arith.constant 0 : index
    %51 = vector.load %arg3[%c160, %c0_28] : memref<400x32xf32, #tpu.memory_space<vmem>>, vector<16x32xf32>
    %cst_29 = arith.constant dense<0.000000e+00> : vector<16x32xf32>
    %52 = tpu.matmul %50, %51, %cst_29 {dimension_numbers = #tpu.dot_dimension_numbers<[1], [0], [0], [1], [0, 0, 1, 1], [], []>} : vector<16x16xf32>, vector<16x32xf32>, vector<16x32xf32> -> vector<16x32xf32>
    %53 = arith.addf %49, %52 : vector<16x32xf32>
    %54 = vector.extract_strided_slice %8 {offsets = [176, 0], sizes = [16, 16], strides = [1, 1]} : vector<400x16xf32> to vector<16x16xf32>
    %c176 = arith.constant 176 : index
    %c0_30 = arith.constant 0 : index
    %55 = vector.load %arg3[%c176, %c0_30] : memref<400x32xf32, #tpu.memory_space<vmem>>, vector<16x32xf32>
    %cst_31 = arith.constant dense<0.000000e+00> : vector<16x32xf32>
    %56 = tpu.matmul %54, %55, %cst_31 {dimension_numbers = #tpu.dot_dimension_numbers<[1], [0], [0], [1], [0, 0, 1, 1], [], []>} : vector<16x16xf32>, vector<16x32xf32>, vector<16x32xf32> -> vector<16x32xf32>
    %57 = arith.addf %53, %56 : vector<16x32xf32>
    %58 = vector.extract_strided_slice %8 {offsets = [192, 0], sizes = [16, 16], strides = [1, 1]} : vector<400x16xf32> to vector<16x16xf32>
    %c192 = arith.constant 192 : index
    %c0_32 = arith.constant 0 : index
    %59 = vector.load %arg3[%c192, %c0_32] : memref<400x32xf32, #tpu.memory_space<vmem>>, vector<16x32xf32>
    %cst_33 = arith.constant dense<0.000000e+00> : vector<16x32xf32>
    %60 = tpu.matmul %58, %59, %cst_33 {dimension_numbers = #tpu.dot_dimension_numbers<[1], [0], [0], [1], [0, 0, 1, 1], [], []>} : vector<16x16xf32>, vector<16x32xf32>, vector<16x32xf32> -> vector<16x32xf32>
    %61 = arith.addf %57, %60 : vector<16x32xf32>
    %62 = vector.extract_strided_slice %8 {offsets = [208, 0], sizes = [16, 16], strides = [1, 1]} : vector<400x16xf32> to vector<16x16xf32>
    %c208 = arith.constant 208 : index
    %c0_34 = arith.constant 0 : index
    %63 = vector.load %arg3[%c208, %c0_34] : memref<400x32xf32, #tpu.memory_space<vmem>>, vector<16x32xf32>
    %cst_35 = arith.constant dense<0.000000e+00> : vector<16x32xf32>
    %64 = tpu.matmul %62, %63, %cst_35 {dimension_numbers = #tpu.dot_dimension_numbers<[1], [0], [0], [1], [0, 0, 1, 1], [], []>} : vector<16x16xf32>, vector<16x32xf32>, vector<16x32xf32> -> vector<16x32xf32>
    %65 = arith.addf %61, %64 : vector<16x32xf32>
    %66 = vector.extract_strided_slice %8 {offsets = [224, 0], sizes = [16, 16], strides = [1, 1]} : vector<400x16xf32> to vector<16x16xf32>
    %c224 = arith.constant 224 : index
    %c0_36 = arith.constant 0 : index
    %67 = vector.load %arg3[%c224, %c0_36] : memref<400x32xf32, #tpu.memory_space<vmem>>, vector<16x32xf32>
    %cst_37 = arith.constant dense<0.000000e+00> : vector<16x32xf32>
    %68 = tpu.matmul %66, %67, %cst_37 {dimension_numbers = #tpu.dot_dimension_numbers<[1], [0], [0], [1], [0, 0, 1, 1], [], []>} : vector<16x16xf32>, vector<16x32xf32>, vector<16x32xf32> -> vector<16x32xf32>
    %69 = arith.addf %65, %68 : vector<16x32xf32>
    %70 = vector.extract_strided_slice %8 {offsets = [240, 0], sizes = [16, 16], strides = [1, 1]} : vector<400x16xf32> to vector<16x16xf32>
    %c240 = arith.constant 240 : index
    %c0_38 = arith.constant 0 : index
    %71 = vector.load %arg3[%c240, %c0_38] : memref<400x32xf32, #tpu.memory_space<vmem>>, vector<16x32xf32>
    %cst_39 = arith.constant dense<0.000000e+00> : vector<16x32xf32>
    %72 = tpu.matmul %70, %71, %cst_39 {dimension_numbers = #tpu.dot_dimension_numbers<[1], [0], [0], [1], [0, 0, 1, 1], [], []>} : vector<16x16xf32>, vector<16x32xf32>, vector<16x32xf32> -> vector<16x32xf32>
    %73 = arith.addf %69, %72 : vector<16x32xf32>
    %74 = vector.extract_strided_slice %8 {offsets = [256, 0], sizes = [16, 16], strides = [1, 1]} : vector<400x16xf32> to vector<16x16xf32>
    %c256 = arith.constant 256 : index
    %c0_40 = arith.constant 0 : index
    %75 = vector.load %arg3[%c256, %c0_40] : memref<400x32xf32, #tpu.memory_space<vmem>>, vector<16x32xf32>
    %cst_41 = arith.constant dense<0.000000e+00> : vector<16x32xf32>
    %76 = tpu.matmul %74, %75, %cst_41 {dimension_numbers = #tpu.dot_dimension_numbers<[1], [0], [0], [1], [0, 0, 1, 1], [], []>} : vector<16x16xf32>, vector<16x32xf32>, vector<16x32xf32> -> vector<16x32xf32>
    %77 = arith.addf %73, %76 : vector<16x32xf32>
    %78 = vector.extract_strided_slice %8 {offsets = [272, 0], sizes = [16, 16], strides = [1, 1]} : vector<400x16xf32> to vector<16x16xf32>
    %c272 = arith.constant 272 : index
    %c0_42 = arith.constant 0 : index
    %79 = vector.load %arg3[%c272, %c0_42] : memref<400x32xf32, #tpu.memory_space<vmem>>, vector<16x32xf32>
    %cst_43 = arith.constant dense<0.000000e+00> : vector<16x32xf32>
    %80 = tpu.matmul %78, %79, %cst_43 {dimension_numbers = #tpu.dot_dimension_numbers<[1], [0], [0], [1], [0, 0, 1, 1], [], []>} : vector<16x16xf32>, vector<16x32xf32>, vector<16x32xf32> -> vector<16x32xf32>
    %81 = arith.addf %77, %80 : vector<16x32xf32>
    %82 = vector.extract_strided_slice %8 {offsets = [288, 0], sizes = [16, 16], strides = [1, 1]} : vector<400x16xf32> to vector<16x16xf32>
    %c288 = arith.constant 288 : index
    %c0_44 = arith.constant 0 : index
    %83 = vector.load %arg3[%c288, %c0_44] : memref<400x32xf32, #tpu.memory_space<vmem>>, vector<16x32xf32>
    %cst_45 = arith.constant dense<0.000000e+00> : vector<16x32xf32>
    %84 = tpu.matmul %82, %83, %cst_45 {dimension_numbers = #tpu.dot_dimension_numbers<[1], [0], [0], [1], [0, 0, 1, 1], [], []>} : vector<16x16xf32>, vector<16x32xf32>, vector<16x32xf32> -> vector<16x32xf32>
    %85 = arith.addf %81, %84 : vector<16x32xf32>
    %86 = vector.extract_strided_slice %8 {offsets = [304, 0], sizes = [16, 16], strides = [1, 1]} : vector<400x16xf32> to vector<16x16xf32>
    %c304 = arith.constant 304 : index
    %c0_46 = arith.constant 0 : index
    %87 = vector.load %arg3[%c304, %c0_46] : memref<400x32xf32, #tpu.memory_space<vmem>>, vector<16x32xf32>
    %cst_47 = arith.constant dense<0.000000e+00> : vector<16x32xf32>
    %88 = tpu.matmul %86, %87, %cst_47 {dimension_numbers = #tpu.dot_dimension_numbers<[1], [0], [0], [1], [0, 0, 1, 1], [], []>} : vector<16x16xf32>, vector<16x32xf32>, vector<16x32xf32> -> vector<16x32xf32>
    %89 = arith.addf %85, %88 : vector<16x32xf32>
    %90 = vector.extract_strided_slice %8 {offsets = [320, 0], sizes = [16, 16], strides = [1, 1]} : vector<400x16xf32> to vector<16x16xf32>
    %c320 = arith.constant 320 : index
    %c0_48 = arith.constant 0 : index
    %91 = vector.load %arg3[%c320, %c0_48] : memref<400x32xf32, #tpu.memory_space<vmem>>, vector<16x32xf32>
    %cst_49 = arith.constant dense<0.000000e+00> : vector<16x32xf32>
    %92 = tpu.matmul %90, %91, %cst_49 {dimension_numbers = #tpu.dot_dimension_numbers<[1], [0], [0], [1], [0, 0, 1, 1], [], []>} : vector<16x16xf32>, vector<16x32xf32>, vector<16x32xf32> -> vector<16x32xf32>
    %93 = arith.addf %89, %92 : vector<16x32xf32>
    %94 = vector.extract_strided_slice %8 {offsets = [336, 0], sizes = [16, 16], strides = [1, 1]} : vector<400x16xf32> to vector<16x16xf32>
    %c336 = arith.constant 336 : index
    %c0_50 = arith.constant 0 : index
    %95 = vector.load %arg3[%c336, %c0_50] : memref<400x32xf32, #tpu.memory_space<vmem>>, vector<16x32xf32>
    %cst_51 = arith.constant dense<0.000000e+00> : vector<16x32xf32>
    %96 = tpu.matmul %94, %95, %cst_51 {dimension_numbers = #tpu.dot_dimension_numbers<[1], [0], [0], [1], [0, 0, 1, 1], [], []>} : vector<16x16xf32>, vector<16x32xf32>, vector<16x32xf32> -> vector<16x32xf32>
    %97 = arith.addf %93, %96 : vector<16x32xf32>
    %98 = vector.extract_strided_slice %8 {offsets = [352, 0], sizes = [16, 16], strides = [1, 1]} : vector<400x16xf32> to vector<16x16xf32>
    %c352 = arith.constant 352 : index
    %c0_52 = arith.constant 0 : index
    %99 = vector.load %arg3[%c352, %c0_52] : memref<400x32xf32, #tpu.memory_space<vmem>>, vector<16x32xf32>
    %cst_53 = arith.constant dense<0.000000e+00> : vector<16x32xf32>
    %100 = tpu.matmul %98, %99, %cst_53 {dimension_numbers = #tpu.dot_dimension_numbers<[1], [0], [0], [1], [0, 0, 1, 1], [], []>} : vector<16x16xf32>, vector<16x32xf32>, vector<16x32xf32> -> vector<16x32xf32>
    %101 = arith.addf %97, %100 : vector<16x32xf32>
    %102 = vector.extract_strided_slice %8 {offsets = [368, 0], sizes = [16, 16], strides = [1, 1]} : vector<400x16xf32> to vector<16x16xf32>
    %c368 = arith.constant 368 : index
    %c0_54 = arith.constant 0 : index
    %103 = vector.load %arg3[%c368, %c0_54] : memref<400x32xf32, #tpu.memory_space<vmem>>, vector<16x32xf32>
    %cst_55 = arith.constant dense<0.000000e+00> : vector<16x32xf32>
    %104 = tpu.matmul %102, %103, %cst_55 {dimension_numbers = #tpu.dot_dimension_numbers<[1], [0], [0], [1], [0, 0, 1, 1], [], []>} : vector<16x16xf32>, vector<16x32xf32>, vector<16x32xf32> -> vector<16x32xf32>
    %105 = arith.addf %101, %104 : vector<16x32xf32>
    %106 = vector.extract_strided_slice %8 {offsets = [384, 0], sizes = [16, 16], strides = [1, 1]} : vector<400x16xf32> to vector<16x16xf32>
    %c384 = arith.constant 384 : index
    %c0_56 = arith.constant 0 : index
    %107 = vector.load %arg3[%c384, %c0_56] : memref<400x32xf32, #tpu.memory_space<vmem>>, vector<16x32xf32>
    %cst_57 = arith.constant dense<0.000000e+00> : vector<16x32xf32>
    %108 = tpu.matmul %106, %107, %cst_57 {dimension_numbers = #tpu.dot_dimension_numbers<[1], [0], [0], [1], [0, 0, 1, 1], [], []>} : vector<16x16xf32>, vector<16x32xf32>, vector<16x32xf32> -> vector<16x32xf32>
    %109 = arith.addf %105, %108 : vector<16x32xf32>
    %c0_58 = arith.constant 0 : index
    %c0_59 = arith.constant 0 : index
    %110 = vector.load %arg4[%c0_58, %c0_59] : memref<1x32xf32, #tpu.memory_space<vmem>>, vector<1x32xf32>
    %111 = vector.broadcast %110 : vector<1x32xf32> to vector<16x32xf32>
    %112 = arith.addf %109, %111 : vector<16x32xf32>
    %cst_60 = arith.constant 0.000000e+00 : f32
    %113 = vector.broadcast %cst_60 : f32 to vector<16x32xf32>
    %114 = arith.maximumf %112, %113 : vector<16x32xf32>
    %115 = vector.extract_strided_slice %114 {offsets = [0, 0], sizes = [4, 32], strides = [1, 1]} : vector<16x32xf32> to vector<4x32xf32>
    %116 = vector.extract_strided_slice %114 {offsets = [4, 0], sizes = [4, 32], strides = [1, 1]} : vector<16x32xf32> to vector<4x32xf32>
    %117 = arith.addf %115, %116 : vector<4x32xf32>
    %118 = vector.extract_strided_slice %114 {offsets = [8, 0], sizes = [4, 32], strides = [1, 1]} : vector<16x32xf32> to vector<4x32xf32>
    %119 = arith.addf %117, %118 : vector<4x32xf32>
    %120 = vector.extract_strided_slice %114 {offsets = [12, 0], sizes = [4, 32], strides = [1, 1]} : vector<16x32xf32> to vector<4x32xf32>
    %121 = arith.addf %119, %120 : vector<4x32xf32>
    %cst_61 = arith.constant 2.500000e-01 : f32
    %122 = vector.broadcast %cst_61 : f32 to vector<4x32xf32>
    %123 = arith.mulf %121, %122 : vector<4x32xf32>
    %c0_62 = arith.constant 0 : index
    %c0_63 = arith.constant 0 : index
    %124 = vector.load %arg5[%c0_62, %c0_63] : memref<32x512xf32, #tpu.memory_space<vmem>>, vector<32x512xf32>
    %cst_64 = arith.constant dense<0.000000e+00> : vector<4x512xf32>
    %125 = tpu.matmul %123, %124, %cst_64 {dimension_numbers = #tpu.dot_dimension_numbers<[1], [0], [0], [1], [0, 0, 1, 1], [], []>} : vector<4x32xf32>, vector<32x512xf32>, vector<4x512xf32> -> vector<4x512xf32>
    %c0_65 = arith.constant 0 : index
    %c0_66 = arith.constant 0 : index
    %126 = vector.load %arg6[%c0_65, %c0_66] : memref<1x512xf32, #tpu.memory_space<vmem>>, vector<1x512xf32>
    %127 = vector.broadcast %126 : vector<1x512xf32> to vector<4x512xf32>
    %128 = arith.addf %125, %127 : vector<4x512xf32>
    %cst_67 = arith.constant 0.000000e+00 : f32
    %129 = vector.broadcast %cst_67 : f32 to vector<4x512xf32>
    %130 = arith.maximumf %128, %129 : vector<4x512xf32>
    %c0_68 = arith.constant 0 : index
    %c0_69 = arith.constant 0 : index
    %131 = vector.load %arg7[%c0_68, %c0_69] : memref<512x7xf32, #tpu.memory_space<vmem>>, vector<512x7xf32>
    %cst_70 = arith.constant dense<0.000000e+00> : vector<4x7xf32>
    %132 = tpu.matmul %130, %131, %cst_70 {dimension_numbers = #tpu.dot_dimension_numbers<[1], [0], [0], [1], [0, 0, 1, 1], [], []>} : vector<4x512xf32>, vector<512x7xf32>, vector<4x7xf32> -> vector<4x7xf32>
    %c0_71 = arith.constant 0 : index
    %c0_72 = arith.constant 0 : index
    %133 = vector.load %arg8[%c0_71, %c0_72] : memref<1x7xf32, #tpu.memory_space<vmem>>, vector<1x7xf32>
    %134 = vector.broadcast %133 : vector<1x7xf32> to vector<4x7xf32>
    %135 = arith.addf %132, %134 : vector<4x7xf32>
    %136 = vector.extract_strided_slice %135 {offsets = [0, 0], sizes = [4, 6], strides = [1, 1]} : vector<4x7xf32> to vector<4x6xf32>
    %cst_73 = arith.constant dense<0xFF800000> : vector<4xf32>
    %137 = vector.multi_reduction <maximumf>, %136, %cst_73 [1] : vector<4x6xf32> to vector<4xf32>
    %138 = vector.shape_cast %137 : vector<4xf32> to vector<4x1xf32>
    %139 = vector.broadcast %138 : vector<4x1xf32> to vector<4x6xf32>
    %140 = arith.subf %136, %139 : vector<4x6xf32>
    %141 = math.exp %140 : vector<4x6xf32>
    %cst_74 = arith.constant dense<0.000000e+00> : vector<4xf32>
    %142 = vector.multi_reduction <add>, %141, %cst_74 [1] : vector<4x6xf32> to vector<4xf32>
    %143 = vector.shape_cast %142 : vector<4xf32> to vector<4x1xf32>
    %144 = vector.broadcast %143 : vector<4x1xf32> to vector<4x6xf32>
    %145 = arith.divf %141, %144 : vector<4x6xf32>
    %c0_75 = arith.constant 0 : index
    %c0_76 = arith.constant 0 : index
    %146 = vector.load %arg9[%c0_75, %c0_76] : memref<4x6xf32, #tpu.memory_space<vmem>>, vector<4x6xf32>
    tpu.vector_store %arg9[%c0_75, %c0_76], %145 {strides = array<i32>} : memref<4x6xf32, #tpu.memory_space<vmem>>, vector<4x6xf32>,
    %147 = vector.extract_strided_slice %135 {offsets = [0, 6], sizes = [4, 1], strides = [1, 1]} : vector<4x7xf32> to vector<4x1xf32>
    %c0_77 = arith.constant 0 : index
    %c0_78 = arith.constant 0 : index
    %148 = vector.load %arg10[%c0_77, %c0_78] : memref<4x1xf32, #tpu.memory_space<vmem>>, vector<4x1xf32>
    tpu.vector_store %arg10[%c0_77, %c0_78], %147 {strides = array<i32>} : memref<4x1xf32, #tpu.memory_space<vmem>>, vector<4x1xf32>,
    return
  }
}

</mosaic_0001>

<llo_original>
// kernel: race_ff_forward.1
$region0: #{race_ff_forward.1}
  #allocation0 [shape = 'u32[]', space=smem, size = 0x4, offset = 0x4, fixed_abs, tag = 'smem constant byte address 0x4 - core index']
  #allocation1 [shape = 'u32[72,128]{1,0:T(1,128)}', space=vmem, size = 0x9000, scoped, tag = 'internal scratch']
  %s0 = inlined_call_operand.vmem [shape: bf16[400,256], index: 0, kind: input, shape index: {}]
  %s1 = inlined_call_operand.vmem [shape: f32[256,16], index: 1, kind: input, shape index: {}]
  %s2 = inlined_call_operand.vmem [shape: f32[1,16], index: 2, kind: input, shape index: {}]
  %s3 = inlined_call_operand.vmem [shape: f32[400,32], index: 3, kind: input, shape index: {}]
  %s4 = inlined_call_operand.vmem [shape: f32[1,32], index: 4, kind: input, shape index: {}]
  %s5 = inlined_call_operand.vmem [shape: f32[32,512], index: 5, kind: input, shape index: {}]
  %s6 = inlined_call_operand.vmem [shape: f32[1,512], index: 6, kind: input, shape index: {}]
  %s7 = inlined_call_operand.vmem [shape: f32[512,7], index: 7, kind: input, shape index: {}]
  %s8 = inlined_call_operand.vmem [shape: f32[1,7], index: 8, kind: input, shape index: {}]
  %s9 = inlined_call_operand.hbm [shape: f32[4,6], index: 9, kind: output, shape index: {0}]
  %s10 = inlined_call_operand.vmem [shape: f32[4,1], index: 10, kind: output, shape index: {1}]
  %11 = xla_tuple %s9, %s10
  %s12 = sld [smem:[#allocation0]]
  $region54: #{race_ff_forward.1} parent=0
    _
  %s14 = ssub.s32 1, %s12
  %s15 = scalar_select 0, %s14, %s12
  $region1: #{race_ff_forward.1} parent=0
    #allocation2 [shape = 'u8[2048]{0}', space=vmem, size = 0x800, scoped, tag = 'output window, operand 0, single buffered']
    #allocation3 [shape = 's32[1]{0}', space=sflag, size = 0x4, scoped, tag = 'scoped memory for race_ff_forward.1']
    %16 = vsyncpa [#allocation3], 0
    // Predicated region
    $region2: #{race_ff_forward.1} parent=1 // pred_check
      _
    $region3: #{race_ff_forward.1} parent=1 // pred_check_branch
      %18 = sbr.rel (0) target = $region5
    $region4: #{race_ff_forward.1} parent=1 // pred_region
      _
    $region5: #{race_ff_forward.1} parent=1 // pred_fallthru
      _
    // Predicated region
    $region6: #{race_ff_forward.1} parent=1 // pred_check
      _
    $region7: #{race_ff_forward.1} parent=1 // pred_check_branch
      %20 = sbr.rel (0) target = $region9
    $region8: #{race_ff_forward.1} parent=1 // pred_region
      _
    $region9: #{race_ff_forward.1} parent=1 // pred_fallthru
      _
    // Predicated region
    $region10: #{race_ff_forward.1} parent=1 // pred_check
      _
    $region11: #{race_ff_forward.1} parent=1 // pred_check_branch
      %22 = sbr.rel (0) target = $region13
    $region12: #{race_ff_forward.1} parent=1 // pred_region
      _
    $region13: #{race_ff_forward.1} parent=1 // pred_fallthru
      _
    // Predicated region
    $region14: #{race_ff_forward.1} parent=1 // pred_check
      _
    $region15: #{race_ff_forward.1} parent=1 // pred_check_branch
      %24 = sbr.rel (0) target = $region17
    $region16: #{race_ff_forward.1} parent=1 // pred_region
      _
    $region17: #{race_ff_forward.1} parent=1 // pred_fallthru
      _
    // Predicated region
    $region18: #{race_ff_forward.1} parent=1 // pred_check
      _
    $region19: #{race_ff_forward.1} parent=1 // pred_check_branch
      %26 = sbr.rel (0) target = $region21
    $region20: #{race_ff_forward.1} parent=1 // pred_region
      _
    $region21: #{race_ff_forward.1} parent=1 // pred_fallthru
      _
    // Predicated region
    $region22: #{race_ff_forward.1} parent=1 // pred_check
      _
    $region23: #{race_ff_forward.1} parent=1 // pred_check_branch
      %28 = sbr.rel (0) target = $region25
    $region24: #{race_ff_forward.1} parent=1 // pred_region
      _
    $region25: #{race_ff_forward.1} parent=1 // pred_fallthru
      _
    // Predicated region
    $region26: #{race_ff_forward.1} parent=1 // pred_check
      _
    $region27: #{race_ff_forward.1} parent=1 // pred_check_branch
      %30 = sbr.rel (0) target = $region29
    $region28: #{race_ff_forward.1} parent=1 // pred_region
      _
    $region29: #{race_ff_forward.1} parent=1 // pred_fallthru
      _
    // Predicated region
    $region30: #{race_ff_forward.1} parent=1 // pred_check
      _
    $region31: #{race_ff_forward.1} parent=1 // pred_check_branch
      %32 = sbr.rel (0) target = $region33
    $region32: #{race_ff_forward.1} parent=1 // pred_region
      _
    $region33: #{race_ff_forward.1} parent=1 // pred_fallthru
      _
    // Predicated region
    $region34: #{race_ff_forward.1} parent=1 // pred_check
      _
    $region35: #{race_ff_forward.1} parent=1 // pred_check_branch
      %34 = sbr.rel (0) target = $region37
    $region36: #{race_ff_forward.1} parent=1 // pred_region
      _
    $region37: #{race_ff_forward.1} parent=1 // pred_fallthru
      _
    %v35 = vld [vmem:[%s0] sm:$0xff]
    %v36 = vld [vmem:[%s0 + $0x8] sm:$0xff]
    %v37 = vld [vmem:[%s0 + $0x10] sm:$0xff]
    %v38 = vld [vmem:[%s0 + $0x18] sm:$0xff]
    %v39 = vld [vmem:[%s0 + $0x20] sm:$0xff]
    %v40 = vld [vmem:[%s0 + $0x28] sm:$0xff]
    %v41 = vld [vmem:[%s0 + $0x30] sm:$0xff]
    %v42 = vld [vmem:[%s0 + $0x38] sm:$0xff]
    %v43 = vld [vmem:[%s0 + $0x40] sm:$0xff]
    %v44 = vld [vmem:[%s0 + $0x48] sm:$0xff]
    %v45 = vld [vmem:[%s0 + $0x50] sm:$0xff]
    %v46 = vld [vmem:[%s0 + $0x58] sm:$0xff]
    %v47 = vld [vmem:[%s0 + $0x60] sm:$0xff]
    %v48 = vld [vmem:[%s0 + $0x68] sm:$0xff]
    %v49 = vld [vmem:[%s0 + $0x70] sm:$0xff]
    %v50 = vld [vmem:[%s0 + $0x78] sm:$0xff]
    %v51 = vld [vmem:[%s0 + $0x80] sm:$0xff]
    %v52 = vld [vmem:[%s0 + $0x88] sm:$0xff]
    %v53 = vld [vmem:[%s0 + $0x90] sm:$0xff]
    %v54 = vld [vmem:[%s0 + $0x98] sm:$0xff]
    %v55 = vld [vmem:[%s0 + $0xa0] sm:$0xff]
    %v56 = vld [vmem:[%s0 + $0xa8] sm:$0xff]
    %v57 = vld [vmem:[%s0 + $0xb0] sm:$0xff]
    %v58 = vld [vmem:[%s0 + $0xb8] sm:$0xff]
    %v59 = vld [vmem:[%s0 + $0xc0] sm:$0xff]
    %v60 = vld [vmem:[%s0 + $0xc8] sm:$0xff]
    %v61 = vld [vmem:[%s0 + $0xd0] sm:$0xff]
    %v62 = vld [vmem:[%s0 + $0xd8] sm:$0xff]
    %v63 = vld [vmem:[%s0 + $0xe0] sm:$0xff]
    %v64 = vld [vmem:[%s0 + $0xe8] sm:$0xff]
    %v65 = vld [vmem:[%s0 + $0xf0] sm:$0xff]
    %v66 = vld [vmem:[%s0 + $0xf8] sm:$0xff]
    %v67 = vld [vmem:[%s0 + $0x100] sm:$0xff]
    %v68 = vld [vmem:[%s0 + $0x108] sm:$0xff]
    %v69 = vld [vmem:[%s0 + $0x110] sm:$0xff]
    %v70 = vld [vmem:[%s0 + $0x118] sm:$0xff]
    %v71 = vld [vmem:[%s0 + $0x120] sm:$0xff]
    %v72 = vld [vmem:[%s0 + $0x128] sm:$0xff]
    %v73 = vld [vmem:[%s0 + $0x130] sm:$0xff]
    %v74 = vld [vmem:[%s0 + $0x138] sm:$0xff]
    %v75 = vld [vmem:[%s0 + $0x140] sm:$0xff]
    %v76 = vld [vmem:[%s0 + $0x148] sm:$0xff]
    %v77 = vld [vmem:[%s0 + $0x150] sm:$0xff]
    %v78 = vld [vmem:[%s0 + $0x158] sm:$0xff]
    %v79 = vld [vmem:[%s0 + $0x160] sm:$0xff]
    %v80 = vld [vmem:[%s0 + $0x168] sm:$0xff]
    %v81 = vld [vmem:[%s0 + $0x170] sm:$0xff]
    %v82 = vld [vmem:[%s0 + $0x178] sm:$0xff]
    %v83 = vld [vmem:[%s0 + $0x180] sm:$0xff]
    %v84 = vld [vmem:[%s0 + $0x188] sm:$0xff]
    %v85 = vunpack.c.l.bf16 %v35
    %v86 = vunpack.c.h.bf16 %v35
    %v87 = vunpack.c.l.bf16 %v36
    %v88 = vunpack.c.h.bf16 %v36
    %v89 = vunpack.c.l.bf16 %v37
    %v90 = vunpack.c.h.bf16 %v37
    %v91 = vunpack.c.l.bf16 %v38
    %v92 = vunpack.c.h.bf16 %v38
    %v93 = vunpack.c.l.bf16 %v39
    %v94 = vunpack.c.h.bf16 %v39
    %v95 = vunpack.c.l.bf16 %v40
    %v96 = vunpack.c.h.bf16 %v40
    %v97 = vunpack.c.l.bf16 %v41
    %v98 = vunpack.c.h.bf16 %v41
    %v99 = vunpack.c.l.bf16 %v42
    %v100 = vunpack.c.h.bf16 %v42
    %v101 = vunpack.c.l.bf16 %v43
    %v102 = vunpack.c.h.bf16 %v43
    %v103 = vunpack.c.l.bf16 %v44
    %v104 = vunpack.c.h.bf16 %v44
    %v105 = vunpack.c.l.bf16 %v45
    %v106 = vunpack.c.h.bf16 %v45
    %v107 = vunpack.c.l.bf16 %v46
    %v108 = vunpack.c.h.bf16 %v46
    %v109 = vunpack.c.l.bf16 %v47
    %v110 = vunpack.c.h.bf16 %v47
    %v111 = vunpack.c.l.bf16 %v48
    %v112 = vunpack.c.h.bf16 %v48
    %v113 = vunpack.c.l.bf16 %v49
    %v114 = vunpack.c.h.bf16 %v49
    %v115 = vunpack.c.l.bf16 %v50
    %v116 = vunpack.c.h.bf16 %v50
    %v117 = vunpack.c.l.bf16 %v51
    %v118 = vunpack.c.h.bf16 %v51
    %v119 = vunpack.c.l.bf16 %v52
    %v120 = vunpack.c.h.bf16 %v52
    %v121 = vunpack.c.l.bf16 %v53
    %v122 = vunpack.c.h.bf16 %v53
    %v123 = vunpack.c.l.bf16 %v54
    %v124 = vunpack.c.h.bf16 %v54
    %v125 = vunpack.c.l.bf16 %v55
    %v126 = vunpack.c.h.bf16 %v55
    %v127 = vunpack.c.l.bf16 %v56
    %v128 = vunpack.c.h.bf16 %v56
    %v129 = vunpack.c.l.bf16 %v57
    %v130 = vunpack.c.h.bf16 %v57
    %v131 = vunpack.c.l.bf16 %v58
    %v132 = vunpack.c.h.bf16 %v58
    %v133 = vunpack.c.l.bf16 %v59
    %v134 = vunpack.c.h.bf16 %v59
    %v135 = vunpack.c.l.bf16 %v60
    %v136 = vunpack.c.h.bf16 %v60
    %v137 = vunpack.c.l.bf16 %v61
    %v138 = vunpack.c.h.bf16 %v61
    %v139 = vunpack.c.l.bf16 %v62
    %v140 = vunpack.c.h.bf16 %v62
    %v141 = vunpack.c.l.bf16 %v63
    %v142 = vunpack.c.h.bf16 %v63
    %v143 = vunpack.c.l.bf16 %v64
    %v144 = vunpack.c.h.bf16 %v64
    %v145 = vunpack.c.l.bf16 %v65
    %v146 = vunpack.c.h.bf16 %v65
    %v147 = vunpack.c.l.bf16 %v66
    %v148 = vunpack.c.h.bf16 %v66
    %v149 = vunpack.c.l.bf16 %v67
    %v150 = vunpack.c.h.bf16 %v67
    %v151 = vunpack.c.l.bf16 %v68
    %v152 = vunpack.c.h.bf16 %v68
    %v153 = vunpack.c.l.bf16 %v69
    %v154 = vunpack.c.h.bf16 %v69
    %v155 = vunpack.c.l.bf16 %v70
    %v156 = vunpack.c.h.bf16 %v70
    %v157 = vunpack.c.l.bf16 %v71
    %v158 = vunpack.c.h.bf16 %v71
    %v159 = vunpack.c.l.bf16 %v72
    %v160 = vunpack.c.h.bf16 %v72
    %v161 = vunpack.c.l.bf16 %v73
    %v162 = vunpack.c.h.bf16 %v73
    %v163 = vunpack.c.l.bf16 %v74
    %v164 = vunpack.c.h.bf16 %v74
    %v165 = vunpack.c.l.bf16 %v75
    %v166 = vunpack.c.h.bf16 %v75
    %v167 = vunpack.c.l.bf16 %v76
    %v168 = vunpack.c.h.bf16 %v76
    %v169 = vunpack.c.l.bf16 %v77
    %v170 = vunpack.c.h.bf16 %v77
    %v171 = vunpack.c.l.bf16 %v78
    %v172 = vunpack.c.h.bf16 %v78
    %v173 = vunpack.c.l.bf16 %v79
    %v174 = vunpack.c.h.bf16 %v79
    %v175 = vunpack.c.l.bf16 %v80
    %v176 = vunpack.c.h.bf16 %v80
    %v177 = vunpack.c.l.bf16 %v81
    %v178 = vunpack.c.h.bf16 %v81
    %v179 = vunpack.c.l.bf16 %v82
    %v180 = vunpack.c.h.bf16 %v82
    %v181 = vunpack.c.l.bf16 %v83
    %v182 = vunpack.c.h.bf16 %v83
    %v183 = vunpack.c.l.bf16 %v84
    %v184 = vunpack.c.h.bf16 %v84
    %v185 = vld [vmem:[%s1] sm:$0xff]
    %v186 = vld [vmem:[%s1 + $0x8] sm:$0xff]
    %v187 = vld [vmem:[%s1 + $0x10] sm:$0xff]
    %v188 = vld [vmem:[%s1 + $0x18] sm:$0xff]
    %v189 = vld [vmem:[%s1 + $0x20] sm:$0xff]
    %v190 = vld [vmem:[%s1 + $0x28] sm:$0xff]
    %v191 = vld [vmem:[%s1 + $0x30] sm:$0xff]
    %v192 = vld [vmem:[%s1 + $0x38] sm:$0xff]
    %v193 = vld [vmem:[%s1 + $0x40] sm:$0xff]
    %v194 = vld [vmem:[%s1 + $0x48] sm:$0xff]
    %v195 = vld [vmem:[%s1 + $0x50] sm:$0xff]
    %v196 = vld [vmem:[%s1 + $0x58] sm:$0xff]
    %v197 = vld [vmem:[%s1 + $0x60] sm:$0xff]
    %v198 = vld [vmem:[%s1 + $0x68] sm:$0xff]
    %v199 = vld [vmem:[%s1 + $0x70] sm:$0xff]
    %v200 = vld [vmem:[%s1 + $0x78] sm:$0xff]
    %v201 = vld [vmem:[%s1 + $0x80] sm:$0xff]
    %v202 = vld [vmem:[%s1 + $0x88] sm:$0xff]
    %v203 = vld [vmem:[%s1 + $0x90] sm:$0xff]
    %v204 = vld [vmem:[%s1 + $0x98] sm:$0xff]
    %v205 = vld [vmem:[%s1 + $0xa0] sm:$0xff]
    %v206 = vld [vmem:[%s1 + $0xa8] sm:$0xff]
    %v207 = vld [vmem:[%s1 + $0xb0] sm:$0xff]
    %v208 = vld [vmem:[%s1 + $0xb8] sm:$0xff]
    %v209 = vld [vmem:[%s1 + $0xc0] sm:$0xff]
    %v210 = vld [vmem:[%s1 + $0xc8] sm:$0xff]
    %v211 = vld [vmem:[%s1 + $0xd0] sm:$0xff]
    %v212 = vld [vmem:[%s1 + $0xd8] sm:$0xff]
    %v213 = vld [vmem:[%s1 + $0xe0] sm:$0xff]
    %v214 = vld [vmem:[%s1 + $0xe8] sm:$0xff]
    %v215 = vld [vmem:[%s1 + $0xf0] sm:$0xff]
    %v216 = vld [vmem:[%s1 + $0xf8] sm:$0xff]
    %v217 = vld [vmem:[%s2] sm:$0x1]
    %v219 = vperm.slane %v217, 0
    %221 = vmatpush.msra.mxu0 %v200
    %222 = vmatpush.msra.mxu0 %v199
    %223 = vmatpush.msra.mxu0 %v198
    %224 = vmatpush.msra.mxu0 %v197
    %225 = vmatpush.msra.mxu0 %v196
    %226 = vmatpush.msra.mxu0 %v195
    %227 = vmatpush.msra.mxu0 %v194
    %228 = vmatpush.msra.mxu0 %v193
    %229 = vmatpush.msra.mxu0 %v192
    %230 = vmatpush.msra.mxu0 %v191
    %231 = vmatpush.msra.mxu0 %v190
    %232 = vmatpush.msra.mxu0 %v189
    %233 = vmatpush.msra.mxu0 %v188
    %234 = vmatpush.msra.mxu0 %v187
    %235 = vmatpush.msra.mxu0 %v186
    %236 = vmatpush.msra.mxu0 %v185
    %237 = vmatmul.f32.gmra.mxu0 %v85
    %v238 = vpop.f32.mrf.mxu0
    %v239 = vadd.f32 %v219, %v238
    %240 = vmatmul.f32.gmra.mxu0 %v87
    %v241 = vpop.f32.mrf.mxu0
    %v242 = vadd.f32 %v219, %v241
    %243 = vmatmul.f32.gmra.mxu0 %v89
    %v244 = vpop.f32.mrf.mxu0
    %v245 = vadd.f32 %v219, %v244
    %246 = vmatmul.f32.gmra.mxu0 %v91
    %v247 = vpop.f32.mrf.mxu0
    %v248 = vadd.f32 %v219, %v247
    %249 = vmatmul.f32.gmra.mxu0 %v93
    %v250 = vpop.f32.mrf.mxu0
    %v251 = vadd.f32 %v219, %v250
    %252 = vmatmul.f32.gmra.mxu0 %v95
    %v253 = vpop.f32.mrf.mxu0
    %v254 = vadd.f32 %v219, %v253
    %255 = vmatmul.f32.gmra.mxu0 %v97
    %v256 = vpop.f32.mrf.mxu0
    %v257 = vadd.f32 %v219, %v256
    %258 = vmatmul.f32.gmra.mxu0 %v99
    %v259 = vpop.f32.mrf.mxu0
    %v260 = vadd.f32 %v219, %v259
    %261 = vmatmul.f32.gmra.mxu0 %v101
    %v262 = vpop.f32.mrf.mxu0
    %v263 = vadd.f32 %v219, %v262
    %264 = vmatmul.f32.gmra.mxu0 %v103
    %v265 = vpop.f32.mrf.mxu0
    %v266 = vadd.f32 %v219, %v265
    %267 = vmatmul.f32.gmra.mxu0 %v105
    %v268 = vpop.f32.mrf.mxu0
    %v269 = vadd.f32 %v219, %v268
    %270 = vmatmul.f32.gmra.mxu0 %v107
    %v271 = vpop.f32.mrf.mxu0
    %v272 = vadd.f32 %v219, %v271
    %273 = vmatmul.f32.gmra.mxu0 %v109
    %v274 = vpop.f32.mrf.mxu0
    %v275 = vadd.f32 %v219, %v274
    %276 = vmatmul.f32.gmra.mxu0 %v111
    %v277 = vpop.f32.mrf.mxu0
    %v278 = vadd.f32 %v219, %v277
    %279 = vmatmul.f32.gmra.mxu0 %v113
    %v280 = vpop.f32.mrf.mxu0
    %v281 = vadd.f32 %v219, %v280
    %282 = vmatmul.f32.gmra.mxu0 %v115
    %v283 = vpop.f32.mrf.mxu0
    %v284 = vadd.f32 %v219, %v283
    %285 = vmatmul.f32.gmra.mxu0 %v117
    %v286 = vpop.f32.mrf.mxu0
    %v287 = vadd.f32 %v219, %v286
    %288 = vmatmul.f32.gmra.mxu0 %v119
    %v289 = vpop.f32.mrf.mxu0
    %v290 = vadd.f32 %v219, %v289
    %291 = vmatmul.f32.gmra.mxu0 %v121
    %v292 = vpop.f32.mrf.mxu0
    %v293 = vadd.f32 %v219, %v292
    %294 = vmatmul.f32.gmra.mxu0 %v123
    %v295 = vpop.f32.mrf.mxu0
    %v296 = vadd.f32 %v219, %v295
    %297 = vmatmul.f32.gmra.mxu0 %v125
    %v298 = vpop.f32.mrf.mxu0
    %v299 = vadd.f32 %v219, %v298
    %300 = vmatmul.f32.gmra.mxu0 %v127
    %v301 = vpop.f32.mrf.mxu0
    %v302 = vadd.f32 %v219, %v301
    %303 = vmatmul.f32.gmra.mxu0 %v129
    %v304 = vpop.f32.mrf.mxu0
    %v305 = vadd.f32 %v219, %v304
    %306 = vmatmul.f32.gmra.mxu0 %v131
    %v307 = vpop.f32.mrf.mxu0
    %v308 = vadd.f32 %v219, %v307
    %309 = vmatmul.f32.gmra.mxu0 %v133
    %v310 = vpop.f32.mrf.mxu0
    %v311 = vadd.f32 %v219, %v310
    %312 = vmatmul.f32.gmra.mxu0 %v135
    %v313 = vpop.f32.mrf.mxu0
    %v314 = vadd.f32 %v219, %v313
    %315 = vmatmul.f32.gmra.mxu0 %v137
    %v316 = vpop.f32.mrf.mxu0
    %v317 = vadd.f32 %v219, %v316
    %318 = vmatmul.f32.gmra.mxu0 %v139
    %v319 = vpop.f32.mrf.mxu0
    %v320 = vadd.f32 %v219, %v319
    %321 = vmatmul.f32.gmra.mxu0 %v141
    %v322 = vpop.f32.mrf.mxu0
    %v323 = vadd.f32 %v219, %v322
    %324 = vmatmul.f32.gmra.mxu0 %v143
    %v325 = vpop.f32.mrf.mxu0
    %v326 = vadd.f32 %v219, %v325
    %327 = vmatmul.f32.gmra.mxu0 %v145
    %v328 = vpop.f32.mrf.mxu0
    %v329 = vadd.f32 %v219, %v328
    %330 = vmatmul.f32.gmra.mxu0 %v147
    %v331 = vpop.f32.mrf.mxu0
    %v332 = vadd.f32 %v219, %v331
    %333 = vmatmul.f32.gmra.mxu0 %v149
    %v334 = vpop.f32.mrf.mxu0
    %v335 = vadd.f32 %v219, %v334
    %336 = vmatmul.f32.gmra.mxu0 %v151
    %v337 = vpop.f32.mrf.mxu0
    %v338 = vadd.f32 %v219, %v337
    %339 = vmatmul.f32.gmra.mxu0 %v153
    %v340 = vpop.f32.mrf.mxu0
    %v341 = vadd.f32 %v219, %v340
    %342 = vmatmul.f32.gmra.mxu0 %v155
    %v343 = vpop.f32.mrf.mxu0
    %v344 = vadd.f32 %v219, %v343
    %345 = vmatmul.f32.gmra.mxu0 %v157
    %v346 = vpop.f32.mrf.mxu0
    %v347 = vadd.f32 %v219, %v346
    %348 = vmatmul.f32.gmra.mxu0 %v159
    %v349 = vpop.f32.mrf.mxu0
    %v350 = vadd.f32 %v219, %v349
    %351 = vmatmul.f32.gmra.mxu0 %v161
    %v352 = vpop.f32.mrf.mxu0
    %v353 = vadd.f32 %v219, %v352
    %354 = vmatmul.f32.gmra.mxu0 %v163
    %v355 = vpop.f32.mrf.mxu0
    %v356 = vadd.f32 %v219, %v355
    %357 = vmatmul.f32.gmra.mxu0 %v165
    %v358 = vpop.f32.mrf.mxu0
    %v359 = vadd.f32 %v219, %v358
    %360 = vmatmul.f32.gmra.mxu0 %v167
    %v361 = vpop.f32.mrf.mxu0
    %v362 = vadd.f32 %v219, %v361
    %363 = vmatmul.f32.gmra.mxu0 %v169
    %v364 = vpop.f32.mrf.mxu0
    %v365 = vadd.f32 %v219, %v364
    %366 = vmatmul.f32.gmra.mxu0 %v171
    %v367 = vpop.f32.mrf.mxu0
    %v368 = vadd.f32 %v219, %v367
    %369 = vmatmul.f32.gmra.mxu0 %v173
    %v370 = vpop.f32.mrf.mxu0
    %v371 = vadd.f32 %v219, %v370
    %372 = vmatmul.f32.gmra.mxu0 %v175
    %v373 = vpop.f32.mrf.mxu0
    %v374 = vadd.f32 %v219, %v373
    %375 = vmatmul.f32.gmra.mxu0 %v177
    %v376 = vpop.f32.mrf.mxu0
    %v377 = vadd.f32 %v219, %v376
    %378 = vmatmul.f32.gmra.mxu0 %v179
    %v379 = vpop.f32.mrf.mxu0
    %v380 = vadd.f32 %v219, %v379
    %381 = vmatmul.f32.gmra.mxu0 %v181
    %v382 = vpop.f32.mrf.mxu0
    %v383 = vadd.f32 %v219, %v382
    %384 = vmatmul.f32.gmra.mxu0 %v183
    %v385 = vpop.f32.mrf.mxu0
    %v386 = vadd.f32 %v219, %v385
    %387 = vdwg.mxu0
    %388 = vmatpush.msra.mxu0 %v216
    %389 = vmatpush.msra.mxu0 %v215
    %390 = vmatpush.msra.mxu0 %v214
    %391 = vmatpush.msra.mxu0 %v213
    %392 = vmatpush.msra.mxu0 %v212
    %393 = vmatpush.msra.mxu0 %v211
    %394 = vmatpush.msra.mxu0 %v210
    %395 = vmatpush.msra.mxu0 %v209
    %396 = vmatpush.msra.mxu0 %v208
    %397 = vmatpush.msra.mxu0 %v207
    %398 = vmatpush.msra.mxu0 %v206
    %399 = vmatpush.msra.mxu0 %v205
    %400 = vmatpush.msra.mxu0 %v204
    %401 = vmatpush.msra.mxu0 %v203
    %402 = vmatpush.msra.mxu0 %v202
    %403 = vmatpush.msra.mxu0 %v201
    %404 = vmatmul.f32.gmra.mxu0 %v86
    %v405 = vpop.f32.mrf.mxu0
    %v406 = vadd.f32 %v239, %v405
    %407 = vmatmul.f32.gmra.mxu0 %v88
    %v408 = vpop.f32.mrf.mxu0
    %v409 = vadd.f32 %v242, %v408
    %410 = vmatmul.f32.gmra.mxu0 %v90
    %v411 = vpop.f32.mrf.mxu0
    %v412 = vadd.f32 %v245, %v411
    %413 = vmatmul.f32.gmra.mxu0 %v92
    %v414 = vpop.f32.mrf.mxu0
    %v415 = vadd.f32 %v248, %v414
    %416 = vmatmul.f32.gmra.mxu0 %v94
    %v417 = vpop.f32.mrf.mxu0
    %v418 = vadd.f32 %v251, %v417
    %419 = vmatmul.f32.gmra.mxu0 %v96
    %v420 = vpop.f32.mrf.mxu0
    %v421 = vadd.f32 %v254, %v420
    %422 = vmatmul.f32.gmra.mxu0 %v98
    %v423 = vpop.f32.mrf.mxu0
    %v424 = vadd.f32 %v257, %v423
    %425 = vmatmul.f32.gmra.mxu0 %v100
    %v426 = vpop.f32.mrf.mxu0
    %v427 = vadd.f32 %v260, %v426
    %428 = vmatmul.f32.gmra.mxu0 %v102
    %v429 = vpop.f32.mrf.mxu0
    %v430 = vadd.f32 %v263, %v429
    %431 = vmatmul.f32.gmra.mxu0 %v104
    %v432 = vpop.f32.mrf.mxu0
    %v433 = vadd.f32 %v266, %v432
    %434 = vmatmul.f32.gmra.mxu0 %v106
    %v435 = vpop.f32.mrf.mxu0
    %v436 = vadd.f32 %v269, %v435
    %437 = vmatmul.f32.gmra.mxu0 %v108
    %v438 = vpop.f32.mrf.mxu0
    %v439 = vadd.f32 %v272, %v438
    %440 = vmatmul.f32.gmra.mxu0 %v110
    %v441 = vpop.f32.mrf.mxu0
    %v442 = vadd.f32 %v275, %v441
    %443 = vmatmul.f32.gmra.mxu0 %v112
    %v444 = vpop.f32.mrf.mxu0
    %v445 = vadd.f32 %v278, %v444
    %446 = vmatmul.f32.gmra.mxu0 %v114
    %v447 = vpop.f32.mrf.mxu0
    %v448 = vadd.f32 %v281, %v447
    %449 = vmatmul.f32.gmra.mxu0 %v116
    %v450 = vpop.f32.mrf.mxu0
    %v451 = vadd.f32 %v284, %v450
    %452 = vmatmul.f32.gmra.mxu0 %v118
    %v453 = vpop.f32.mrf.mxu0
    %v454 = vadd.f32 %v287, %v453
    %455 = vmatmul.f32.gmra.mxu0 %v120
    %v456 = vpop.f32.mrf.mxu0
    %v457 = vadd.f32 %v290, %v456
    %458 = vmatmul.f32.gmra.mxu0 %v122
    %v459 = vpop.f32.mrf.mxu0
    %v460 = vadd.f32 %v293, %v459
    %461 = vmatmul.f32.gmra.mxu0 %v124
    %v462 = vpop.f32.mrf.mxu0
    %v463 = vadd.f32 %v296, %v462
    %464 = vmatmul.f32.gmra.mxu0 %v126
    %v465 = vpop.f32.mrf.mxu0
    %v466 = vadd.f32 %v299, %v465
    %467 = vmatmul.f32.gmra.mxu0 %v128
    %v468 = vpop.f32.mrf.mxu0
    %v469 = vadd.f32 %v302, %v468
    %470 = vmatmul.f32.gmra.mxu0 %v130
    %v471 = vpop.f32.mrf.mxu0
    %v472 = vadd.f32 %v305, %v471
    %473 = vmatmul.f32.gmra.mxu0 %v132
    %v474 = vpop.f32.mrf.mxu0
    %v475 = vadd.f32 %v308, %v474
    %476 = vmatmul.f32.gmra.mxu0 %v134
    %v477 = vpop.f32.mrf.mxu0
    %v478 = vadd.f32 %v311, %v477
    %479 = vmatmul.f32.gmra.mxu0 %v136
    %v480 = vpop.f32.mrf.mxu0
    %v481 = vadd.f32 %v314, %v480
    %482 = vmatmul.f32.gmra.mxu0 %v138
    %v483 = vpop.f32.mrf.mxu0
    %v484 = vadd.f32 %v317, %v483
    %485 = vmatmul.f32.gmra.mxu0 %v140
    %v486 = vpop.f32.mrf.mxu0
    %v487 = vadd.f32 %v320, %v486
    %488 = vmatmul.f32.gmra.mxu0 %v142
    %v489 = vpop.f32.mrf.mxu0
    %v490 = vadd.f32 %v323, %v489
    %491 = vmatmul.f32.gmra.mxu0 %v144
    %v492 = vpop.f32.mrf.mxu0
    %v493 = vadd.f32 %v326, %v492
    %494 = vmatmul.f32.gmra.mxu0 %v146
    %v495 = vpop.f32.mrf.mxu0
    %v496 = vadd.f32 %v329, %v495
    %497 = vmatmul.f32.gmra.mxu0 %v148
    %v498 = vpop.f32.mrf.mxu0
    %v499 = vadd.f32 %v332, %v498
    %500 = vmatmul.f32.gmra.mxu0 %v150
    %v501 = vpop.f32.mrf.mxu0
    %v502 = vadd.f32 %v335, %v501
    %503 = vmatmul.f32.gmra.mxu0 %v152
    %v504 = vpop.f32.mrf.mxu0
    %v505 = vadd.f32 %v338, %v504
    %506 = vmatmul.f32.gmra.mxu0 %v154
    %v507 = vpop.f32.mrf.mxu0
    %v508 = vadd.f32 %v341, %v507
    %509 = vmatmul.f32.gmra.mxu0 %v156
    %v510 = vpop.f32.mrf.mxu0
    %v511 = vadd.f32 %v344, %v510
    %512 = vmatmul.f32.gmra.mxu0 %v158
    %v513 = vpop.f32.mrf.mxu0
    %v514 = vadd.f32 %v347, %v513
    %515 = vmatmul.f32.gmra.mxu0 %v160
    %v516 = vpop.f32.mrf.mxu0
    %v517 = vadd.f32 %v350, %v516
    %518 = vmatmul.f32.gmra.mxu0 %v162
    %v519 = vpop.f32.mrf.mxu0
    %v520 = vadd.f32 %v353, %v519
    %521 = vmatmul.f32.gmra.mxu0 %v164
    %v522 = vpop.f32.mrf.mxu0
    %v523 = vadd.f32 %v356, %v522
    %524 = vmatmul.f32.gmra.mxu0 %v166
    %v525 = vpop.f32.mrf.mxu0
    %v526 = vadd.f32 %v359, %v525
    %527 = vmatmul.f32.gmra.mxu0 %v168
    %v528 = vpop.f32.mrf.mxu0
    %v529 = vadd.f32 %v362, %v528
    %530 = vmatmul.f32.gmra.mxu0 %v170
    %v531 = vpop.f32.mrf.mxu0
    %v532 = vadd.f32 %v365, %v531
    %533 = vmatmul.f32.gmra.mxu0 %v172
    %v534 = vpop.f32.mrf.mxu0
    %v535 = vadd.f32 %v368, %v534
    %536 = vmatmul.f32.gmra.mxu0 %v174
    %v537 = vpop.f32.mrf.mxu0
    %v538 = vadd.f32 %v371, %v537
    %539 = vmatmul.f32.gmra.mxu0 %v176
    %v540 = vpop.f32.mrf.mxu0
    %v541 = vadd.f32 %v374, %v540
    %542 = vmatmul.f32.gmra.mxu0 %v178
    %v543 = vpop.f32.mrf.mxu0
    %v544 = vadd.f32 %v377, %v543
    %545 = vmatmul.f32.gmra.mxu0 %v180
    %v546 = vpop.f32.mrf.mxu0
    %v547 = vadd.f32 %v380, %v546
    %548 = vmatmul.f32.gmra.mxu0 %v182
    %v549 = vpop.f32.mrf.mxu0
    %v550 = vadd.f32 %v383, %v549
    %551 = vmatmul.f32.gmra.mxu0 %v184
    %v552 = vpop.f32.mrf.mxu0
    %v553 = vadd.f32 %v386, %v552
    %554 = vdwg.mxu0
    %v555 = vmax.f32 %v406, 0.0
    %v556 = vmax.f32 %v409, 0.0
    %v557 = vmax.f32 %v412, 0.0
    %v558 = vmax.f32 %v415, 0.0
    %v559 = vmax.f32 %v418, 0.0
    %v560 = vmax.f32 %v421, 0.0
    %v561 = vmax.f32 %v424, 0.0
    %v562 = vmax.f32 %v427, 0.0
    %v563 = vmax.f32 %v430, 0.0
    %v564 = vmax.f32 %v433, 0.0
    %v565 = vmax.f32 %v436, 0.0
    %v566 = vmax.f32 %v439, 0.0
    %v567 = vmax.f32 %v442, 0.0
    %v568 = vmax.f32 %v445, 0.0
    %v569 = vmax.f32 %v448, 0.0
    %v570 = vmax.f32 %v451, 0.0
    %v571 = vmax.f32 %v454, 0.0
    %v572 = vmax.f32 %v457, 0.0
    %v573 = vmax.f32 %v460, 0.0
    %v574 = vmax.f32 %v463, 0.0
    %v575 = vmax.f32 %v466, 0.0
    %v576 = vmax.f32 %v469, 0.0
    %v577 = vmax.f32 %v472, 0.0
    %v578 = vmax.f32 %v475, 0.0
    %v579 = vmax.f32 %v478, 0.0
    %v580 = vmax.f32 %v481, 0.0
    %v581 = vmax.f32 %v484, 0.0
    %v582 = vmax.f32 %v487, 0.0
    %v583 = vmax.f32 %v490, 0.0
    %v584 = vmax.f32 %v493, 0.0
    %v585 = vmax.f32 %v496, 0.0
    %v586 = vmax.f32 %v499, 0.0
    %v587 = vmax.f32 %v502, 0.0
    %v588 = vmax.f32 %v505, 0.0
    %v589 = vmax.f32 %v508, 0.0
    %v590 = vmax.f32 %v511, 0.0
    %v591 = vmax.f32 %v514, 0.0
    %v592 = vmax.f32 %v517, 0.0
    %v593 = vmax.f32 %v520, 0.0
    %v594 = vmax.f32 %v523, 0.0
    %v595 = vmax.f32 %v526, 0.0
    %v596 = vmax.f32 %v529, 0.0
    %v597 = vmax.f32 %v532, 0.0
    %v598 = vmax.f32 %v535, 0.0
    %v599 = vmax.f32 %v538, 0.0
    %v600 = vmax.f32 %v541, 0.0
    %v601 = vmax.f32 %v544, 0.0
    %v602 = vmax.f32 %v547, 0.0
    %v603 = vmax.f32 %v550, 0.0
    %v604 = vmax.f32 %v553, 0.0
    %v605 = vld [vmem:[%s3] sm:$0xff]
    %v606 = vld [vmem:[%s3 + $0x8] sm:$0xff]
    %v607 = vld [vmem:[%s3 + $0x10] sm:$0xff]
    %v608 = vld [vmem:[%s3 + $0x18] sm:$0xff]
    %vm609 = vcmask 130048
    %v611 = vsel %vm609, %v557, 0
    %v614 = vsel %vm609, %v558, 0
    %616 = vmatpush.msra.mxu0 0.0
    %617 = vmatpush.msra.mxu0 0.0
    %618 = vmatpush.msra.mxu0 0.0
    %619 = vmatpush.msra.mxu0 0.0
    %620 = vmatpush.msra.mxu0 0.0
    %621 = vmatpush.msra.mxu0 0.0
    %622 = vmatpush.msra.mxu0 0.0
    %623 = vmatpush.msra.mxu0 0.0
    %624 = vmatpush.msra.mxu0 0.0
    %625 = vmatpush.msra.mxu0 0.0
    %626 = vmatpush.msra.mxu0 0.0
    %627 = vmatpush.msra.mxu0 0.0
    %628 = vmatpush.msra.mxu0 0.0
    %629 = vmatpush.msra.mxu0 0.0
    %630 = vmatpush.msra.mxu0 %v608
    %631 = vmatpush.msra.mxu0 %v607
    %632 = vmatmul.f32.gmra.mxu0 %v611
    %v633 = vpop.f32.mrf.mxu0
    %v634 = vadd.f32 0.0, %v633
    %635 = vmatmul.f32.gmra.mxu0 %v614
    %v636 = vpop.f32.mrf.mxu0
    %v637 = vadd.f32 0.0, %v636
    %638 = vdwg.mxu0
    %v640 = vsel %vm609, %v555, 0
    %v643 = vsel %vm609, %v556, 0
    %645 = vmatpush.msra.mxu0 0.0
    %646 = vmatpush.msra.mxu0 0.0
    %647 = vmatpush.msra.mxu0 0.0
    %648 = vmatpush.msra.mxu0 0.0
    %649 = vmatpush.msra.mxu0 0.0
    %650 = vmatpush.msra.mxu0 0.0
    %651 = vmatpush.msra.mxu0 0.0
    %652 = vmatpush.msra.mxu0 0.0
    %653 = vmatpush.msra.mxu0 0.0
    %654 = vmatpush.msra.mxu0 0.0
    %655 = vmatpush.msra.mxu0 0.0
    %656 = vmatpush.msra.mxu0 0.0
    %657 = vmatpush.msra.mxu0 0.0
    %658 = vmatpush.msra.mxu0 0.0
    %659 = vmatpush.msra.mxu0 %v606
    %660 = vmatpush.msra.mxu0 %v605
    %661 = vmatmul.f32.gmra.mxu0 %v640
    %v662 = vpop.f32.mrf.mxu0
    %v663 = vadd.f32 %v634, %v662
    %664 = vmatmul.f32.gmra.mxu0 %v643
    %v665 = vpop.f32.mrf.mxu0
    %v666 = vadd.f32 %v637, %v665
    %667 = vdwg.mxu0
    %v668 = vld [vmem:[%s3 + $0x20] sm:$0xff]
    %v669 = vld [vmem:[%s3 + $0x28] sm:$0xff]
    %v671 = vsel %vm609, %v559, 0
    %v674 = vsel %vm609, %v560, 0
    %676 = vmatpush.msra.mxu0 0.0
    %677 = vmatpush.msra.mxu0 0.0
    %678 = vmatpush.msra.mxu0 0.0
    %679 = vmatpush.msra.mxu0 0.0
    %680 = vmatpush.msra.mxu0 0.0
    %681 = vmatpush.msra.mxu0 0.0
    %682 = vmatpush.msra.mxu0 0.0
    %683 = vmatpush.msra.mxu0 0.0
    %684 = vmatpush.msra.mxu0 0.0
    %685 = vmatpush.msra.mxu0 0.0
    %686 = vmatpush.msra.mxu0 0.0
    %687 = vmatpush.msra.mxu0 0.0
    %688 = vmatpush.msra.mxu0 0.0
    %689 = vmatpush.msra.mxu0 0.0
    %690 = vmatpush.msra.mxu0 %v669
    %691 = vmatpush.msra.mxu0 %v668
    %692 = vmatmul.f32.gmra.mxu0 %v671
    %v693 = vpop.f32.mrf.mxu0
    %v694 = vadd.f32 0.0, %v693
    %695 = vmatmul.f32.gmra.mxu0 %v674
    %v696 = vpop.f32.mrf.mxu0
    %v697 = vadd.f32 0.0, %v696
    %698 = vdwg.mxu0
    %v699 = vadd.f32 %v663, %v694
    %v700 = vadd.f32 %v666, %v697
    %v701 = vld [vmem:[%s3 + $0x30] sm:$0xff]
    %v702 = vld [vmem:[%s3 + $0x38] sm:$0xff]
    %v704 = vsel %vm609, %v561, 0
    %v707 = vsel %vm609, %v562, 0
    %709 = vmatpush.msra.mxu0 0.0
    %710 = vmatpush.msra.mxu0 0.0
    %711 = vmatpush.msra.mxu0 0.0
    %712 = vmatpush.msra.mxu0 0.0
    %713 = vmatpush.msra.mxu0 0.0
    %714 = vmatpush.msra.mxu0 0.0
    %715 = vmatpush.msra.mxu0 0.0
    %716 = vmatpush.msra.mxu0 0.0
    %717 = vmatpush.msra.mxu0 0.0
    %718 = vmatpush.msra.mxu0 0.0
    %719 = vmatpush.msra.mxu0 0.0
    %720 = vmatpush.msra.mxu0 0.0
    %721 = vmatpush.msra.mxu0 0.0
    %722 = vmatpush.msra.mxu0 0.0
    %723 = vmatpush.msra.mxu0 %v702
    %724 = vmatpush.msra.mxu0 %v701
    %725 = vmatmul.f32.gmra.mxu0 %v704
    %v726 = vpop.f32.mrf.mxu0
    %v727 = vadd.f32 0.0, %v726
    %728 = vmatmul.f32.gmra.mxu0 %v707
    %v729 = vpop.f32.mrf.mxu0
    %v730 = vadd.f32 0.0, %v729
    %731 = vdwg.mxu0
    %v732 = vadd.f32 %v699, %v727
    %v733 = vadd.f32 %v700, %v730
    %v734 = vld [vmem:[%s3 + $0x40] sm:$0xff]
    %v735 = vld [vmem:[%s3 + $0x48] sm:$0xff]
    %v737 = vsel %vm609, %v563, 0
    %v740 = vsel %vm609, %v564, 0
    %742 = vmatpush.msra.mxu0 0.0
    %743 = vmatpush.msra.mxu0 0.0
    %744 = vmatpush.msra.mxu0 0.0
    %745 = vmatpush.msra.mxu0 0.0
    %746 = vmatpush.msra.mxu0 0.0
    %747 = vmatpush.msra.mxu0 0.0
    %748 = vmatpush.msra.mxu0 0.0
    %749 = vmatpush.msra.mxu0 0.0
    %750 = vmatpush.msra.mxu0 0.0
    %751 = vmatpush.msra.mxu0 0.0
    %752 = vmatpush.msra.mxu0 0.0
    %753 = vmatpush.msra.mxu0 0.0
    %754 = vmatpush.msra.mxu0 0.0
    %755 = vmatpush.msra.mxu0 0.0
    %756 = vmatpush.msra.mxu0 %v735
    %757 = vmatpush.msra.mxu0 %v734
    %758 = vmatmul.f32.gmra.mxu0 %v737
    %v759 = vpop.f32.mrf.mxu0
    %v760 = vadd.f32 0.0, %v759
    %761 = vmatmul.f32.gmra.mxu0 %v740
    %v762 = vpop.f32.mrf.mxu0
    %v763 = vadd.f32 0.0, %v762
    %764 = vdwg.mxu0
    %v765 = vadd.f32 %v732, %v760
    %v766 = vadd.f32 %v733, %v763
    %v767 = vld [vmem:[%s3 + $0x50] sm:$0xff]
    %v768 = vld [vmem:[%s3 + $0x58] sm:$0xff]
    %v770 = vsel %vm609, %v565, 0
    %v773 = vsel %vm609, %v566, 0
    %775 = vmatpush.msra.mxu0 0.0
    %776 = vmatpush.msra.mxu0 0.0
    %777 = vmatpush.msra.mxu0 0.0
    %778 = vmatpush.msra.mxu0 0.0
    %779 = vmatpush.msra.mxu0 0.0
    %780 = vmatpush.msra.mxu0 0.0
    %781 = vmatpush.msra.mxu0 0.0
    %782 = vmatpush.msra.mxu0 0.0
    %783 = vmatpush.msra.mxu0 0.0
    %784 = vmatpush.msra.mxu0 0.0
    %785 = vmatpush.msra.mxu0 0.0
    %786 = vmatpush.msra.mxu0 0.0
    %787 = vmatpush.msra.mxu0 0.0
    %788 = vmatpush.msra.mxu0 0.0
    %789 = vmatpush.msra.mxu0 %v768
    %790 = vmatpush.msra.mxu0 %v767
    %791 = vmatmul.f32.gmra.mxu0 %v770
    %v792 = vpop.f32.mrf.mxu0
    %v793 = vadd.f32 0.0, %v792
    %794 = vmatmul.f32.gmra.mxu0 %v773
    %v795 = vpop.f32.mrf.mxu0
    %v796 = vadd.f32 0.0, %v795
    %797 = vdwg.mxu0
    %v798 = vadd.f32 %v765, %v793
    %v799 = vadd.f32 %v766, %v796
    %v800 = vld [vmem:[%s3 + $0x60] sm:$0xff]
    %v801 = vld [vmem:[%s3 + $0x68] sm:$0xff]
    %v803 = vsel %vm609, %v567, 0
    %v806 = vsel %vm609, %v568, 0
    %808 = vmatpush.msra.mxu0 0.0
    %809 = vmatpush.msra.mxu0 0.0
    %810 = vmatpush.msra.mxu0 0.0
    %811 = vmatpush.msra.mxu0 0.0
    %812 = vmatpush.msra.mxu0 0.0
    %813 = vmatpush.msra.mxu0 0.0
    %814 = vmatpush.msra.mxu0 0.0
    %815 = vmatpush.msra.mxu0 0.0
    %816 = vmatpush.msra.mxu0 0.0
    %817 = vmatpush.msra.mxu0 0.0
    %818 = vmatpush.msra.mxu0 0.0
    %819 = vmatpush.msra.mxu0 0.0
    %820 = vmatpush.msra.mxu0 0.0
    %821 = vmatpush.msra.mxu0 0.0
    %822 = vmatpush.msra.mxu0 %v801
    %823 = vmatpush.msra.mxu0 %v800
    %824 = vmatmul.f32.gmra.mxu0 %v803
    %v825 = vpop.f32.mrf.mxu0
    %v826 = vadd.f32 0.0, %v825
    %827 = vmatmul.f32.gmra.mxu0 %v806
    %v828 = vpop.f32.mrf.mxu0
    %v829 = vadd.f32 0.0, %v828
    %830 = vdwg.mxu0
    %v831 = vadd.f32 %v798, %v826
    %v832 = vadd.f32 %v799, %v829
    %v833 = vld [vmem:[%s3 + $0x70] sm:$0xff]
    %v834 = vld [vmem:[%s3 + $0x78] sm:$0xff]
    %v836 = vsel %vm609, %v569, 0
    %v839 = vsel %vm609, %v570, 0
    %841 = vmatpush.msra.mxu0 0.0
    %842 = vmatpush.msra.mxu0 0.0
    %843 = vmatpush.msra.mxu0 0.0
    %844 = vmatpush.msra.mxu0 0.0
    %845 = vmatpush.msra.mxu0 0.0
    %846 = vmatpush.msra.mxu0 0.0
    %847 = vmatpush.msra.mxu0 0.0
    %848 = vmatpush.msra.mxu0 0.0
    %849 = vmatpush.msra.mxu0 0.0
    %850 = vmatpush.msra.mxu0 0.0
    %851 = vmatpush.msra.mxu0 0.0
    %852 = vmatpush.msra.mxu0 0.0
    %853 = vmatpush.msra.mxu0 0.0
    %854 = vmatpush.msra.mxu0 0.0
    %855 = vmatpush.msra.mxu0 %v834
    %856 = vmatpush.msra.mxu0 %v833
    %857 = vmatmul.f32.gmra.mxu0 %v836
    %v858 = vpop.f32.mrf.mxu0
    %v859 = vadd.f32 0.0, %v858
    %860 = vmatmul.f32.gmra.mxu0 %v839
    %v861 = vpop.f32.mrf.mxu0
    %v862 = vadd.f32 0.0, %v861
    %863 = vdwg.mxu0
    %v864 = vadd.f32 %v831, %v859
    %v865 = vadd.f32 %v832, %v862
    %v866 = vld [vmem:[%s3 + $0x80] sm:$0xff]
    %v867 = vld [vmem:[%s3 + $0x88] sm:$0xff]
    %v869 = vsel %vm609, %v571, 0
    %v872 = vsel %vm609, %v572, 0
    %874 = vmatpush.msra.mxu0 0.0
    %875 = vmatpush.msra.mxu0 0.0
    %876 = vmatpush.msra.mxu0 0.0
    %877 = vmatpush.msra.mxu0 0.0
    %878 = vmatpush.msra.mxu0 0.0
    %879 = vmatpush.msra.mxu0 0.0
    %880 = vmatpush.msra.mxu0 0.0
    %881 = vmatpush.msra.mxu0 0.0
    %882 = vmatpush.msra.mxu0 0.0
    %883 = vmatpush.msra.mxu0 0.0
    %884 = vmatpush.msra.mxu0 0.0
    %885 = vmatpush.msra.mxu0 0.0
    %886 = vmatpush.msra.mxu0 0.0
    %887 = vmatpush.msra.mxu0 0.0
    %888 = vmatpush.msra.mxu0 %v867
    %889 = vmatpush.msra.mxu0 %v866
    %890 = vmatmul.f32.gmra.mxu0 %v869
    %v891 = vpop.f32.mrf.mxu0
    %v892 = vadd.f32 0.0, %v891
    %893 = vmatmul.f32.gmra.mxu0 %v872
    %v894 = vpop.f32.mrf.mxu0
    %v895 = vadd.f32 0.0, %v894
    %896 = vdwg.mxu0
    %v897 = vadd.f32 %v864, %v892
    %v898 = vadd.f32 %v865, %v895
    %v899 = vld [vmem:[%s3 + $0x90] sm:$0xff]
    %v900 = vld [vmem:[%s3 + $0x98] sm:$0xff]
    %v902 = vsel %vm609, %v573, 0
    %v905 = vsel %vm609, %v574, 0
    %907 = vmatpush.msra.mxu0 0.0
    %908 = vmatpush.msra.mxu0 0.0
    %909 = vmatpush.msra.mxu0 0.0
    %910 = vmatpush.msra.mxu0 0.0
    %911 = vmatpush.msra.mxu0 0.0
    %912 = vmatpush.msra.mxu0 0.0
    %913 = vmatpush.msra.mxu0 0.0
    %914 = vmatpush.msra.mxu0 0.0
    %915 = vmatpush.msra.mxu0 0.0
    %916 = vmatpush.msra.mxu0 0.0
    %917 = vmatpush.msra.mxu0 0.0
    %918 = vmatpush.msra.mxu0 0.0
    %919 = vmatpush.msra.mxu0 0.0
    %920 = vmatpush.msra.mxu0 0.0
    %921 = vmatpush.msra.mxu0 %v900
    %922 = vmatpush.msra.mxu0 %v899
    %923 = vmatmul.f32.gmra.mxu0 %v902
    %v924 = vpop.f32.mrf.mxu0
    %v925 = vadd.f32 0.0, %v924
    %926 = vmatmul.f32.gmra.mxu0 %v905
    %v927 = vpop.f32.mrf.mxu0
    %v928 = vadd.f32 0.0, %v927
    %929 = vdwg.mxu0
    %v930 = vadd.f32 %v897, %v925
    %v931 = vadd.f32 %v898, %v928
    %v932 = vld [vmem:[%s3 + $0xa0] sm:$0xff]
    %v933 = vld [vmem:[%s3 + $0xa8] sm:$0xff]
    %v935 = vsel %vm609, %v575, 0
    %v938 = vsel %vm609, %v576, 0
    %940 = vmatpush.msra.mxu0 0.0
    %941 = vmatpush.msra.mxu0 0.0
    %942 = vmatpush.msra.mxu0 0.0
    %943 = vmatpush.msra.mxu0 0.0
    %944 = vmatpush.msra.mxu0 0.0
    %945 = vmatpush.msra.mxu0 0.0
    %946 = vmatpush.msra.mxu0 0.0
    %947 = vmatpush.msra.mxu0 0.0
    %948 = vmatpush.msra.mxu0 0.0
    %949 = vmatpush.msra.mxu0 0.0
    %950 = vmatpush.msra.mxu0 0.0
    %951 = vmatpush.msra.mxu0 0.0
    %952 = vmatpush.msra.mxu0 0.0
    %953 = vmatpush.msra.mxu0 0.0
    %954 = vmatpush.msra.mxu0 %v933
    %955 = vmatpush.msra.mxu0 %v932
    %956 = vmatmul.f32.gmra.mxu0 %v935
    %v957 = vpop.f32.mrf.mxu0
    %v958 = vadd.f32 0.0, %v957
    %959 = vmatmul.f32.gmra.mxu0 %v938
    %v960 = vpop.f32.mrf.mxu0
    %v961 = vadd.f32 0.0, %v960
    %962 = vdwg.mxu0
    %v963 = vadd.f32 %v930, %v958
    %v964 = vadd.f32 %v931, %v961
    %v965 = vld [vmem:[%s3 + $0xb0] sm:$0xff]
    %v966 = vld [vmem:[%s3 + $0xb8] sm:$0xff]
    %v968 = vsel %vm609, %v577, 0
    %v971 = vsel %vm609, %v578, 0
    %973 = vmatpush.msra.mxu0 0.0
    %974 = vmatpush.msra.mxu0 0.0
    %975 = vmatpush.msra.mxu0 0.0
    %976 = vmatpush.msra.mxu0 0.0
    %977 = vmatpush.msra.mxu0 0.0
    %978 = vmatpush.msra.mxu0 0.0
    %979 = vmatpush.msra.mxu0 0.0
    %980 = vmatpush.msra.mxu0 0.0
    %981 = vmatpush.msra.mxu0 0.0
    %982 = vmatpush.msra.mxu0 0.0
    %983 = vmatpush.msra.mxu0 0.0
    %984 = vmatpush.msra.mxu0 0.0
    %985 = vmatpush.msra.mxu0 0.0
    %986 = vmatpush.msra.mxu0 0.0
    %987 = vmatpush.msra.mxu0 %v966
    %988 = vmatpush.msra.mxu0 %v965
    %989 = vmatmul.f32.gmra.mxu0 %v968
    %v990 = vpop.f32.mrf.mxu0
    %v991 = vadd.f32 0.0, %v990
    %992 = vmatmul.f32.gmra.mxu0 %v971
    %v993 = vpop.f32.mrf.mxu0
    %v994 = vadd.f32 0.0, %v993
    %995 = vdwg.mxu0
    %v996 = vadd.f32 %v963, %v991
    %v997 = vadd.f32 %v964, %v994
    %v998 = vld [vmem:[%s3 + $0xc0] sm:$0xff]
    %v999 = vld [vmem:[%s3 + $0xc8] sm:$0xff]
    %v1001 = vsel %vm609, %v579, 0
    %v1004 = vsel %vm609, %v580, 0
    %1006 = vmatpush.msra.mxu0 0.0
    %1007 = vmatpush.msra.mxu0 0.0
    %1008 = vmatpush.msra.mxu0 0.0
    %1009 = vmatpush.msra.mxu0 0.0
    %1010 = vmatpush.msra.mxu0 0.0
    %1011 = vmatpush.msra.mxu0 0.0
    %1012 = vmatpush.msra.mxu0 0.0
    %1013 = vmatpush.msra.mxu0 0.0
    %1014 = vmatpush.msra.mxu0 0.0
    %1015 = vmatpush.msra.mxu0 0.0
    %1016 = vmatpush.msra.mxu0 0.0
    %1017 = vmatpush.msra.mxu0 0.0
    %1018 = vmatpush.msra.mxu0 0.0
    %1019 = vmatpush.msra.mxu0 0.0
    %1020 = vmatpush.msra.mxu0 %v999
    %1021 = vmatpush.msra.mxu0 %v998
    %1022 = vmatmul.f32.gmra.mxu0 %v1001
    %v1023 = vpop.f32.mrf.mxu0
    %v1024 = vadd.f32 0.0, %v1023
    %1025 = vmatmul.f32.gmra.mxu0 %v1004
    %v1026 = vpop.f32.mrf.mxu0
    %v1027 = vadd.f32 0.0, %v1026
    %1028 = vdwg.mxu0
    %v1029 = vadd.f32 %v996, %v1024
    %v1030 = vadd.f32 %v997, %v1027
    %v1031 = vld [vmem:[%s3 + $0xd0] sm:$0xff]
    %v1032 = vld [vmem:[%s3 + $0xd8] sm:$0xff]
    %v1034 = vsel %vm609, %v581, 0
    %v1037 = vsel %vm609, %v582, 0
    %1039 = vmatpush.msra.mxu0 0.0
    %1040 = vmatpush.msra.mxu0 0.0
    %1041 = vmatpush.msra.mxu0 0.0
    %1042 = vmatpush.msra.mxu0 0.0
    %1043 = vmatpush.msra.mxu0 0.0
    %1044 = vmatpush.msra.mxu0 0.0
    %1045 = vmatpush.msra.mxu0 0.0
    %1046 = vmatpush.msra.mxu0 0.0
    %1047 = vmatpush.msra.mxu0 0.0
    %1048 = vmatpush.msra.mxu0 0.0
    %1049 = vmatpush.msra.mxu0 0.0
    %1050 = vmatpush.msra.mxu0 0.0
    %1051 = vmatpush.msra.mxu0 0.0
    %1052 = vmatpush.msra.mxu0 0.0
    %1053 = vmatpush.msra.mxu0 %v1032
    %1054 = vmatpush.msra.mxu0 %v1031
    %1055 = vmatmul.f32.gmra.mxu0 %v1034
    %v1056 = vpop.f32.mrf.mxu0
    %v1057 = vadd.f32 0.0, %v1056
    %1058 = vmatmul.f32.gmra.mxu0 %v1037
    %v1059 = vpop.f32.mrf.mxu0
    %v1060 = vadd.f32 0.0, %v1059
    %1061 = vdwg.mxu0
    %v1062 = vadd.f32 %v1029, %v1057
    %v1063 = vadd.f32 %v1030, %v1060
    %v1064 = vld [vmem:[%s3 + $0xe0] sm:$0xff]
    %v1065 = vld [vmem:[%s3 + $0xe8] sm:$0xff]
    %v1067 = vsel %vm609, %v583, 0
    %v1070 = vsel %vm609, %v584, 0
    %1072 = vmatpush.msra.mxu0 0.0
    %1073 = vmatpush.msra.mxu0 0.0
    %1074 = vmatpush.msra.mxu0 0.0
    %1075 = vmatpush.msra.mxu0 0.0
    %1076 = vmatpush.msra.mxu0 0.0
    %1077 = vmatpush.msra.mxu0 0.0
    %1078 = vmatpush.msra.mxu0 0.0
    %1079 = vmatpush.msra.mxu0 0.0
    %1080 = vmatpush.msra.mxu0 0.0
    %1081 = vmatpush.msra.mxu0 0.0
    %1082 = vmatpush.msra.mxu0 0.0
    %1083 = vmatpush.msra.mxu0 0.0
    %1084 = vmatpush.msra.mxu0 0.0
    %1085 = vmatpush.msra.mxu0 0.0
    %1086 = vmatpush.msra.mxu0 %v1065
    %1087 = vmatpush.msra.mxu0 %v1064
    %1088 = vmatmul.f32.gmra.mxu0 %v1067
    %v1089 = vpop.f32.mrf.mxu0
    %v1090 = vadd.f32 0.0, %v1089
    %1091 = vmatmul.f32.gmra.mxu0 %v1070
    %v1092 = vpop.f32.mrf.mxu0
    %v1093 = vadd.f32 0.0, %v1092
    %1094 = vdwg.mxu0
    %v1095 = vadd.f32 %v1062, %v1090
    %v1096 = vadd.f32 %v1063, %v1093
    %v1097 = vld [vmem:[%s3 + $0xf0] sm:$0xff]
    %v1098 = vld [vmem:[%s3 + $0xf8] sm:$0xff]
    %v1100 = vsel %vm609, %v585, 0
    %v1103 = vsel %vm609, %v586, 0
    %1105 = vmatpush.msra.mxu0 0.0
    %1106 = vmatpush.msra.mxu0 0.0
    %1107 = vmatpush.msra.mxu0 0.0
    %1108 = vmatpush.msra.mxu0 0.0
    %1109 = vmatpush.msra.mxu0 0.0
    %1110 = vmatpush.msra.mxu0 0.0
    %1111 = vmatpush.msra.mxu0 0.0
    %1112 = vmatpush.msra.mxu0 0.0
    %1113 = vmatpush.msra.mxu0 0.0
    %1114 = vmatpush.msra.mxu0 0.0
    %1115 = vmatpush.msra.mxu0 0.0
    %1116 = vmatpush.msra.mxu0 0.0
    %1117 = vmatpush.msra.mxu0 0.0
    %1118 = vmatpush.msra.mxu0 0.0
    %1119 = vmatpush.msra.mxu0 %v1098
    %1120 = vmatpush.msra.mxu0 %v1097
    %1121 = vmatmul.f32.gmra.mxu0 %v1100
    %v1122 = vpop.f32.mrf.mxu0
    %v1123 = vadd.f32 0.0, %v1122
    %1124 = vmatmul.f32.gmra.mxu0 %v1103
    %v1125 = vpop.f32.mrf.mxu0
    %v1126 = vadd.f32 0.0, %v1125
    %1127 = vdwg.mxu0
    %v1128 = vadd.f32 %v1095, %v1123
    %v1129 = vadd.f32 %v1096, %v1126
    %v1130 = vld [vmem:[%s3 + $0x100] sm:$0xff]
    %v1131 = vld [vmem:[%s3 + $0x108] sm:$0xff]
    %v1133 = vsel %vm609, %v587, 0
    %v1136 = vsel %vm609, %v588, 0
    %1138 = vmatpush.msra.mxu0 0.0
    %1139 = vmatpush.msra.mxu0 0.0
    %1140 = vmatpush.msra.mxu0 0.0
    %1141 = vmatpush.msra.mxu0 0.0
    %1142 = vmatpush.msra.mxu0 0.0
    %1143 = vmatpush.msra.mxu0 0.0
    %1144 = vmatpush.msra.mxu0 0.0
    %1145 = vmatpush.msra.mxu0 0.0
    %1146 = vmatpush.msra.mxu0 0.0
    %1147 = vmatpush.msra.mxu0 0.0
    %1148 = vmatpush.msra.mxu0 0.0
    %1149 = vmatpush.msra.mxu0 0.0
    %1150 = vmatpush.msra.mxu0 0.0
    %1151 = vmatpush.msra.mxu0 0.0
    %1152 = vmatpush.msra.mxu0 %v1131
    %1153 = vmatpush.msra.mxu0 %v1130
    %1154 = vmatmul.f32.gmra.mxu0 %v1133
    %v1155 = vpop.f32.mrf.mxu0
    %v1156 = vadd.f32 0.0, %v1155
    %1157 = vmatmul.f32.gmra.mxu0 %v1136
    %v1158 = vpop.f32.mrf.mxu0
    %v1159 = vadd.f32 0.0, %v1158
    %1160 = vdwg.mxu0
    %v1161 = vadd.f32 %v1128, %v1156
    %v1162 = vadd.f32 %v1129, %v1159
    %v1163 = vld [vmem:[%s3 + $0x110] sm:$0xff]
    %v1164 = vld [vmem:[%s3 + $0x118] sm:$0xff]
    %v1166 = vsel %vm609, %v589, 0
    %v1169 = vsel %vm609, %v590, 0
    %1171 = vmatpush.msra.mxu0 0.0
    %1172 = vmatpush.msra.mxu0 0.0
    %1173 = vmatpush.msra.mxu0 0.0
    %1174 = vmatpush.msra.mxu0 0.0
    %1175 = vmatpush.msra.mxu0 0.0
    %1176 = vmatpush.msra.mxu0 0.0
    %1177 = vmatpush.msra.mxu0 0.0
    %1178 = vmatpush.msra.mxu0 0.0
    %1179 = vmatpush.msra.mxu0 0.0
    %1180 = vmatpush.msra.mxu0 0.0
    %1181 = vmatpush.msra.mxu0 0.0
    %1182 = vmatpush.msra.mxu0 0.0
    %1183 = vmatpush.msra.mxu0 0.0
    %1184 = vmatpush.msra.mxu0 0.0
    %1185 = vmatpush.msra.mxu0 %v1164
    %1186 = vmatpush.msra.mxu0 %v1163
    %1187 = vmatmul.f32.gmra.mxu0 %v1166
    %v1188 = vpop.f32.mrf.mxu0
    %v1189 = vadd.f32 0.0, %v1188
    %1190 = vmatmul.f32.gmra.mxu0 %v1169
    %v1191 = vpop.f32.mrf.mxu0
    %v1192 = vadd.f32 0.0, %v1191
    %1193 = vdwg.mxu0
    %v1194 = vadd.f32 %v1161, %v1189
    %v1195 = vadd.f32 %v1162, %v1192
    %v1196 = vld [vmem:[%s3 + $0x120] sm:$0xff]
    %v1197 = vld [vmem:[%s3 + $0x128] sm:$0xff]
    %v1199 = vsel %vm609, %v591, 0
    %v1202 = vsel %vm609, %v592, 0
    %1204 = vmatpush.msra.mxu0 0.0
    %1205 = vmatpush.msra.mxu0 0.0
    %1206 = vmatpush.msra.mxu0 0.0
    %1207 = vmatpush.msra.mxu0 0.0
    %1208 = vmatpush.msra.mxu0 0.0
    %1209 = vmatpush.msra.mxu0 0.0
    %1210 = vmatpush.msra.mxu0 0.0
    %1211 = vmatpush.msra.mxu0 0.0
    %1212 = vmatpush.msra.mxu0 0.0
    %1213 = vmatpush.msra.mxu0 0.0
    %1214 = vmatpush.msra.mxu0 0.0
    %1215 = vmatpush.msra.mxu0 0.0
    %1216 = vmatpush.msra.mxu0 0.0
    %1217 = vmatpush.msra.mxu0 0.0
    %1218 = vmatpush.msra.mxu0 %v1197
    %1219 = vmatpush.msra.mxu0 %v1196
    %1220 = vmatmul.f32.gmra.mxu0 %v1199
    %v1221 = vpop.f32.mrf.mxu0
    %v1222 = vadd.f32 0.0, %v1221
    %1223 = vmatmul.f32.gmra.mxu0 %v1202
    %v1224 = vpop.f32.mrf.mxu0
    %v1225 = vadd.f32 0.0, %v1224
    %1226 = vdwg.mxu0
    %v1227 = vadd.f32 %v1194, %v1222
    %v1228 = vadd.f32 %v1195, %v1225
    %v1229 = vld [vmem:[%s3 + $0x130] sm:$0xff]
    %v1230 = vld [vmem:[%s3 + $0x138] sm:$0xff]
    %v1232 = vsel %vm609, %v593, 0
    %v1235 = vsel %vm609, %v594, 0
    %1237 = vmatpush.msra.mxu0 0.0
    %1238 = vmatpush.msra.mxu0 0.0
    %1239 = vmatpush.msra.mxu0 0.0
    %1240 = vmatpush.msra.mxu0 0.0
    %1241 = vmatpush.msra.mxu0 0.0
    %1242 = vmatpush.msra.mxu0 0.0
    %1243 = vmatpush.msra.mxu0 0.0
    %1244 = vmatpush.msra.mxu0 0.0
    %1245 = vmatpush.msra.mxu0 0.0
    %1246 = vmatpush.msra.mxu0 0.0
    %1247 = vmatpush.msra.mxu0 0.0
    %1248 = vmatpush.msra.mxu0 0.0
    %1249 = vmatpush.msra.mxu0 0.0
    %1250 = vmatpush.msra.mxu0 0.0
    %1251 = vmatpush.msra.mxu0 %v1230
    %1252 = vmatpush.msra.mxu0 %v1229
    %1253 = vmatmul.f32.gmra.mxu0 %v1232
    %v1254 = vpop.f32.mrf.mxu0
    %v1255 = vadd.f32 0.0, %v1254
    %1256 = vmatmul.f32.gmra.mxu0 %v1235
    %v1257 = vpop.f32.mrf.mxu0
    %v1258 = vadd.f32 0.0, %v1257
    %1259 = vdwg.mxu0
    %v1260 = vadd.f32 %v1227, %v1255
    %v1261 = vadd.f32 %v1228, %v1258
    %v1262 = vld [vmem:[%s3 + $0x140] sm:$0xff]
    %v1263 = vld [vmem:[%s3 + $0x148] sm:$0xff]
    %v1265 = vsel %vm609, %v595, 0
    %v1268 = vsel %vm609, %v596, 0
    %1270 = vmatpush.msra.mxu0 0.0
    %1271 = vmatpush.msra.mxu0 0.0
    %1272 = vmatpush.msra.mxu0 0.0
    %1273 = vmatpush.msra.mxu0 0.0
    %1274 = vmatpush.msra.mxu0 0.0
    %1275 = vmatpush.msra.mxu0 0.0
    %1276 = vmatpush.msra.mxu0 0.0
    %1277 = vmatpush.msra.mxu0 0.0
    %1278 = vmatpush.msra.mxu0 0.0
    %1279 = vmatpush.msra.mxu0 0.0
    %1280 = vmatpush.msra.mxu0 0.0
    %1281 = vmatpush.msra.mxu0 0.0
    %1282 = vmatpush.msra.mxu0 0.0
    %1283 = vmatpush.msra.mxu0 0.0
    %1284 = vmatpush.msra.mxu0 %v1263
    %1285 = vmatpush.msra.mxu0 %v1262
    %1286 = vmatmul.f32.gmra.mxu0 %v1265
    %v1287 = vpop.f32.mrf.mxu0
    %v1288 = vadd.f32 0.0, %v1287
    %1289 = vmatmul.f32.gmra.mxu0 %v1268
    %v1290 = vpop.f32.mrf.mxu0
    %v1291 = vadd.f32 0.0, %v1290
    %1292 = vdwg.mxu0
    %v1293 = vadd.f32 %v1260, %v1288
    %v1294 = vadd.f32 %v1261, %v1291
    %v1295 = vld [vmem:[%s3 + $0x150] sm:$0xff]
    %v1296 = vld [vmem:[%s3 + $0x158] sm:$0xff]
    %v1298 = vsel %vm609, %v597, 0
    %v1301 = vsel %vm609, %v598, 0
    %1303 = vmatpush.msra.mxu0 0.0
    %1304 = vmatpush.msra.mxu0 0.0
    %1305 = vmatpush.msra.mxu0 0.0
    %1306 = vmatpush.msra.mxu0 0.0
    %1307 = vmatpush.msra.mxu0 0.0
    %1308 = vmatpush.msra.mxu0 0.0
    %1309 = vmatpush.msra.mxu0 0.0
    %1310 = vmatpush.msra.mxu0 0.0
    %1311 = vmatpush.msra.mxu0 0.0
    %1312 = vmatpush.msra.mxu0 0.0
    %1313 = vmatpush.msra.mxu0 0.0
    %1314 = vmatpush.msra.mxu0 0.0
    %1315 = vmatpush.msra.mxu0 0.0
    %1316 = vmatpush.msra.mxu0 0.0
    %1317 = vmatpush.msra.mxu0 %v1296
    %1318 = vmatpush.msra.mxu0 %v1295
    %1319 = vmatmul.f32.gmra.mxu0 %v1298
    %v1320 = vpop.f32.mrf.mxu0
    %v1321 = vadd.f32 0.0, %v1320
    %1322 = vmatmul.f32.gmra.mxu0 %v1301
    %v1323 = vpop.f32.mrf.mxu0
    %v1324 = vadd.f32 0.0, %v1323
    %1325 = vdwg.mxu0
    %v1326 = vadd.f32 %v1293, %v1321
    %v1327 = vadd.f32 %v1294, %v1324
    %v1328 = vld [vmem:[%s3 + $0x160] sm:$0xff]
    %v1329 = vld [vmem:[%s3 + $0x168] sm:$0xff]
    %v1331 = vsel %vm609, %v599, 0
    %v1334 = vsel %vm609, %v600, 0
    %1336 = vmatpush.msra.mxu0 0.0
    %1337 = vmatpush.msra.mxu0 0.0
    %1338 = vmatpush.msra.mxu0 0.0
    %1339 = vmatpush.msra.mxu0 0.0
    %1340 = vmatpush.msra.mxu0 0.0
    %1341 = vmatpush.msra.mxu0 0.0
    %1342 = vmatpush.msra.mxu0 0.0
    %1343 = vmatpush.msra.mxu0 0.0
    %1344 = vmatpush.msra.mxu0 0.0
    %1345 = vmatpush.msra.mxu0 0.0
    %1346 = vmatpush.msra.mxu0 0.0
    %1347 = vmatpush.msra.mxu0 0.0
    %1348 = vmatpush.msra.mxu0 0.0
    %1349 = vmatpush.msra.mxu0 0.0
    %1350 = vmatpush.msra.mxu0 %v1329
    %1351 = vmatpush.msra.mxu0 %v1328
    %1352 = vmatmul.f32.gmra.mxu0 %v1331
    %v1353 = vpop.f32.mrf.mxu0
    %v1354 = vadd.f32 0.0, %v1353
    %1355 = vmatmul.f32.gmra.mxu0 %v1334
    %v1356 = vpop.f32.mrf.mxu0
    %v1357 = vadd.f32 0.0, %v1356
    %1358 = vdwg.mxu0
    %v1359 = vadd.f32 %v1326, %v1354
    %v1360 = vadd.f32 %v1327, %v1357
    %v1361 = vld [vmem:[%s3 + $0x170] sm:$0xff]
    %v1362 = vld [vmem:[%s3 + $0x178] sm:$0xff]
    %v1364 = vsel %vm609, %v601, 0
    %v1367 = vsel %vm609, %v602, 0
    %1369 = vmatpush.msra.mxu0 0.0
    %1370 = vmatpush.msra.mxu0 0.0
    %1371 = vmatpush.msra.mxu0 0.0
    %1372 = vmatpush.msra.mxu0 0.0
    %1373 = vmatpush.msra.mxu0 0.0
    %1374 = vmatpush.msra.mxu0 0.0
    %1375 = vmatpush.msra.mxu0 0.0
    %1376 = vmatpush.msra.mxu0 0.0
    %1377 = vmatpush.msra.mxu0 0.0
    %1378 = vmatpush.msra.mxu0 0.0
    %1379 = vmatpush.msra.mxu0 0.0
    %1380 = vmatpush.msra.mxu0 0.0
    %1381 = vmatpush.msra.mxu0 0.0
    %1382 = vmatpush.msra.mxu0 0.0
    %1383 = vmatpush.msra.mxu0 %v1362
    %1384 = vmatpush.msra.mxu0 %v1361
    %1385 = vmatmul.f32.gmra.mxu0 %v1364
    %v1386 = vpop.f32.mrf.mxu0
    %v1387 = vadd.f32 0.0, %v1386
    %1388 = vmatmul.f32.gmra.mxu0 %v1367
    %v1389 = vpop.f32.mrf.mxu0
    %v1390 = vadd.f32 0.0, %v1389
    %1391 = vdwg.mxu0
    %v1392 = vadd.f32 %v1359, %v1387
    %v1393 = vadd.f32 %v1360, %v1390
    %v1394 = vld [vmem:[%s3 + $0x180] sm:$0xff]
    %v1395 = vld [vmem:[%s3 + $0x188] sm:$0xff]
    %v1397 = vsel %vm609, %v603, 0
    %v1400 = vsel %vm609, %v604, 0
    %1402 = vmatpush.msra.mxu0 0.0
    %1403 = vmatpush.msra.mxu0 0.0
    %1404 = vmatpush.msra.mxu0 0.0
    %1405 = vmatpush.msra.mxu0 0.0
    %1406 = vmatpush.msra.mxu0 0.0
    %1407 = vmatpush.msra.mxu0 0.0
    %1408 = vmatpush.msra.mxu0 0.0
    %1409 = vmatpush.msra.mxu0 0.0
    %1410 = vmatpush.msra.mxu0 0.0
    %1411 = vmatpush.msra.mxu0 0.0
    %1412 = vmatpush.msra.mxu0 0.0
    %1413 = vmatpush.msra.mxu0 0.0
    %1414 = vmatpush.msra.mxu0 0.0
    %1415 = vmatpush.msra.mxu0 0.0
    %1416 = vmatpush.msra.mxu0 %v1395
    %1417 = vmatpush.msra.mxu0 %v1394
    %1418 = vmatmul.f32.gmra.mxu0 %v1397
    %v1419 = vpop.f32.mrf.mxu0
    %v1420 = vadd.f32 0.0, %v1419
    %1421 = vmatmul.f32.gmra.mxu0 %v1400
    %v1422 = vpop.f32.mrf.mxu0
    %v1423 = vadd.f32 0.0, %v1422
    %1424 = vdwg.mxu0
    %v1425 = vadd.f32 %v1392, %v1420
    %v1426 = vadd.f32 %v1393, %v1423
    %v1427 = vld [vmem:[%s4] sm:$0x1]
    %v1429 = vperm.slane %v1427, 0
    %v1431 = vadd.f32 %v1425, %v1429
    %v1432 = vadd.f32 %v1426, %v1429
    %v1433 = vmax.f32 %v1431, 0.0
    %v1434 = vmax.f32 %v1432, 0.0
    %v1436 = vrot.slane %v1433, 4
    %v1438 = vadd.f32 %v1433, %v1436
    %v1439 = vadd.f32 %v1438, %v1434
    %v1441 = vrot.slane %v1434, 4
    %v1443 = vadd.f32 %v1439, %v1441
    %v1444 = vmul.f32 %v1443, 0.25
    %v1445 = vld [vmem:[%s5] sm:$0xff]
    %v1446 = vld [vmem:[%s5 + $0x8] sm:$0xff]
    %v1447 = vld [vmem:[%s5 + $0x10] sm:$0xff]
    %v1448 = vld [vmem:[%s5 + $0x18] sm:$0xff]
    %v1449 = vld [vmem:[%s5 + $0x20] sm:$0xff]
    %v1450 = vld [vmem:[%s5 + $0x28] sm:$0xff]
    %v1451 = vld [vmem:[%s5 + $0x30] sm:$0xff]
    %v1452 = vld [vmem:[%s5 + $0x38] sm:$0xff]
    %v1453 = vld [vmem:[%s5 + $0x40] sm:$0xff]
    %v1454 = vld [vmem:[%s5 + $0x48] sm:$0xff]
    %v1455 = vld [vmem:[%s5 + $0x50] sm:$0xff]
    %v1456 = vld [vmem:[%s5 + $0x58] sm:$0xff]
    %v1457 = vld [vmem:[%s5 + $0x60] sm:$0xff]
    %v1458 = vld [vmem:[%s5 + $0x68] sm:$0xff]
    %v1459 = vld [vmem:[%s5 + $0x70] sm:$0xff]
    %v1460 = vld [vmem:[%s5 + $0x78] sm:$0xff]
    %v1461 = vld [vmem:[%s6] sm:$0xf]
    %v1463 = vperm.slane %v1461, 0
    %v1464 = vperm.slane %v1461, 1
    %v1465 = vperm.slane %v1461, 2
    %v1466 = vperm.slane %v1461, 3
    %vm1471 = vcmask 261120
    %v1473 = vsel %vm1471, %v1444, 0
    %1475 = vmatpush.msra.mxu0 0.0
    %1476 = vmatpush.msra.mxu0 0.0
    %1477 = vmatpush.msra.mxu0 0.0
    %1478 = vmatpush.msra.mxu0 0.0
    %1479 = vmatpush.msra.mxu0 0.0
    %1480 = vmatpush.msra.mxu0 0.0
    %1481 = vmatpush.msra.mxu0 0.0
    %1482 = vmatpush.msra.mxu0 0.0
    %1483 = vmatpush.msra.mxu0 0.0
    %1484 = vmatpush.msra.mxu0 0.0
    %1485 = vmatpush.msra.mxu0 0.0
    %1486 = vmatpush.msra.mxu0 0.0
    %1487 = vmatpush.msra.mxu0 %v1457
    %1488 = vmatpush.msra.mxu0 %v1453
    %1489 = vmatpush.msra.mxu0 %v1449
    %1490 = vmatpush.msra.mxu0 %v1445
    %1491 = vmatmul.f32.gmra.mxu0 %v1473
    %v1492 = vpop.f32.mrf.mxu0
    %v1493 = vadd.f32 %v1463, %v1492
    %1494 = vdwg.mxu0
    %1495 = vmatpush.msra.mxu0 0.0
    %1496 = vmatpush.msra.mxu0 0.0
    %1497 = vmatpush.msra.mxu0 0.0
    %1498 = vmatpush.msra.mxu0 0.0
    %1499 = vmatpush.msra.mxu0 0.0
    %1500 = vmatpush.msra.mxu0 0.0
    %1501 = vmatpush.msra.mxu0 0.0
    %1502 = vmatpush.msra.mxu0 0.0
    %1503 = vmatpush.msra.mxu0 0.0
    %1504 = vmatpush.msra.mxu0 0.0
    %1505 = vmatpush.msra.mxu0 0.0
    %1506 = vmatpush.msra.mxu0 0.0
    %1507 = vmatpush.msra.mxu0 %v1458
    %1508 = vmatpush.msra.mxu0 %v1454
    %1509 = vmatpush.msra.mxu0 %v1450
    %1510 = vmatpush.msra.mxu0 %v1446
    %1511 = vmatmul.f32.gmra.mxu0 %v1473
    %v1512 = vpop.f32.mrf.mxu0
    %v1513 = vadd.f32 %v1464, %v1512
    %1514 = vdwg.mxu0
    %1515 = vmatpush.msra.mxu0 0.0
    %1516 = vmatpush.msra.mxu0 0.0
    %1517 = vmatpush.msra.mxu0 0.0
    %1518 = vmatpush.msra.mxu0 0.0
    %1519 = vmatpush.msra.mxu0 0.0
    %1520 = vmatpush.msra.mxu0 0.0
    %1521 = vmatpush.msra.mxu0 0.0
    %1522 = vmatpush.msra.mxu0 0.0
    %1523 = vmatpush.msra.mxu0 0.0
    %1524 = vmatpush.msra.mxu0 0.0
    %1525 = vmatpush.msra.mxu0 0.0
    %1526 = vmatpush.msra.mxu0 0.0
    %1527 = vmatpush.msra.mxu0 %v1459
    %1528 = vmatpush.msra.mxu0 %v1455
    %1529 = vmatpush.msra.mxu0 %v1451
    %1530 = vmatpush.msra.mxu0 %v1447
    %1531 = vmatmul.f32.gmra.mxu0 %v1473
    %v1532 = vpop.f32.mrf.mxu0
    %v1533 = vadd.f32 %v1465, %v1532
    %1534 = vdwg.mxu0
    %1535 = vmatpush.msra.mxu0 0.0
    %1536 = vmatpush.msra.mxu0 0.0
    %1537 = vmatpush.msra.mxu0 0.0
    %1538 = vmatpush.msra.mxu0 0.0
    %1539 = vmatpush.msra.mxu0 0.0
    %1540 = vmatpush.msra.mxu0 0.0
    %1541 = vmatpush.msra.mxu0 0.0
    %1542 = vmatpush.msra.mxu0 0.0
    %1543 = vmatpush.msra.mxu0 0.0
    %1544 = vmatpush.msra.mxu0 0.0
    %1545 = vmatpush.msra.mxu0 0.0
    %1546 = vmatpush.msra.mxu0 0.0
    %1547 = vmatpush.msra.mxu0 %v1460
    %1548 = vmatpush.msra.mxu0 %v1456
    %1549 = vmatpush.msra.mxu0 %v1452
    %1550 = vmatpush.msra.mxu0 %v1448
    %1551 = vmatmul.f32.gmra.mxu0 %v1473
    %v1552 = vpop.f32.mrf.mxu0
    %v1553 = vadd.f32 %v1466, %v1552
    %1554 = vdwg.mxu0
    %v1555 = vmax.f32 %v1493, 0.0
    %v1556 = vmax.f32 %v1513, 0.0
    %v1557 = vmax.f32 %v1533, 0.0
    %v1558 = vmax.f32 %v1553, 0.0
    %v1559 = vld [vmem:[%s7] sm:$0xff]
    %v1560 = vld [vmem:[%s7 + $0x8] sm:$0xff]
    %v1561 = vld [vmem:[%s7 + $0x10] sm:$0xff]
    %v1562 = vld [vmem:[%s7 + $0x18] sm:$0xff]
    %v1563 = vld [vmem:[%s7 + $0x20] sm:$0xff]
    %v1564 = vld [vmem:[%s7 + $0x28] sm:$0xff]
    %v1565 = vld [vmem:[%s7 + $0x30] sm:$0xff]
    %v1566 = vld [vmem:[%s7 + $0x38] sm:$0xff]
    %v1567 = vld [vmem:[%s7 + $0x40] sm:$0xff]
    %v1568 = vld [vmem:[%s7 + $0x48] sm:$0xff]
    %v1569 = vld [vmem:[%s7 + $0x50] sm:$0xff]
    %v1570 = vld [vmem:[%s7 + $0x58] sm:$0xff]
    %v1571 = vld [vmem:[%s7 + $0x60] sm:$0xff]
    %v1572 = vld [vmem:[%s7 + $0x68] sm:$0xff]
    %v1573 = vld [vmem:[%s7 + $0x70] sm:$0xff]
    %v1574 = vld [vmem:[%s7 + $0x78] sm:$0xff]
    %v1575 = vld [vmem:[%s7 + $0x80] sm:$0xff]
    %v1576 = vld [vmem:[%s7 + $0x88] sm:$0xff]
    %v1577 = vld [vmem:[%s7 + $0x90] sm:$0xff]
    %v1578 = vld [vmem:[%s7 + $0x98] sm:$0xff]
    %v1579 = vld [vmem:[%s7 + $0xa0] sm:$0xff]
    %v1580 = vld [vmem:[%s7 + $0xa8] sm:$0xff]
    %v1581 = vld [vmem:[%s7 + $0xb0] sm:$0xff]
    %v1582 = vld [vmem:[%s7 + $0xb8] sm:$0xff]
    %v1583 = vld [vmem:[%s7 + $0xc0] sm:$0xff]
    %v1584 = vld [vmem:[%s7 + $0xc8] sm:$0xff]
    %v1585 = vld [vmem:[%s7 + $0xd0] sm:$0xff]
    %v1586 = vld [vmem:[%s7 + $0xd8] sm:$0xff]
    %v1587 = vld [vmem:[%s7 + $0xe0] sm:$0xff]
    %v1588 = vld [vmem:[%s7 + $0xe8] sm:$0xff]
    %v1589 = vld [vmem:[%s7 + $0xf0] sm:$0xff]
    %v1590 = vld [vmem:[%s7 + $0xf8] sm:$0xff]
    %v1591 = vld [vmem:[%s7 + $0x100] sm:$0xff]
    %v1592 = vld [vmem:[%s7 + $0x108] sm:$0xff]
    %v1593 = vld [vmem:[%s7 + $0x110] sm:$0xff]
    %v1594 = vld [vmem:[%s7 + $0x118] sm:$0xff]
    %v1595 = vld [vmem:[%s7 + $0x120] sm:$0xff]
    %v1596 = vld [vmem:[%s7 + $0x128] sm:$0xff]
    %v1597 = vld [vmem:[%s7 + $0x130] sm:$0xff]
    %v1598 = vld [vmem:[%s7 + $0x138] sm:$0xff]
    %v1599 = vld [vmem:[%s7 + $0x140] sm:$0xff]
    %v1600 = vld [vmem:[%s7 + $0x148] sm:$0xff]
    %v1601 = vld [vmem:[%s7 + $0x150] sm:$0xff]
    %v1602 = vld [vmem:[%s7 + $0x158] sm:$0xff]
    %v1603 = vld [vmem:[%s7 + $0x160] sm:$0xff]
    %v1604 = vld [vmem:[%s7 + $0x168] sm:$0xff]
    %v1605 = vld [vmem:[%s7 + $0x170] sm:$0xff]
    %v1606 = vld [vmem:[%s7 + $0x178] sm:$0xff]
    %v1607 = vld [vmem:[%s7 + $0x180] sm:$0xff]
    %v1608 = vld [vmem:[%s7 + $0x188] sm:$0xff]
    %v1609 = vld [vmem:[%s7 + $0x190] sm:$0xff]
    %v1610 = vld [vmem:[%s7 + $0x198] sm:$0xff]
    %v1611 = vld [vmem:[%s7 + $0x1a0] sm:$0xff]
    %v1612 = vld [vmem:[%s7 + $0x1a8] sm:$0xff]
    %v1613 = vld [vmem:[%s7 + $0x1b0] sm:$0xff]
    %v1614 = vld [vmem:[%s7 + $0x1b8] sm:$0xff]
    %v1615 = vld [vmem:[%s7 + $0x1c0] sm:$0xff]
    %v1616 = vld [vmem:[%s7 + $0x1c8] sm:$0xff]
    %v1617 = vld [vmem:[%s7 + $0x1d0] sm:$0xff]
    %v1618 = vld [vmem:[%s7 + $0x1d8] sm:$0xff]
    %v1619 = vld [vmem:[%s7 + $0x1e0] sm:$0xff]
    %v1620 = vld [vmem:[%s7 + $0x1e8] sm:$0xff]
    %v1621 = vld [vmem:[%s7 + $0x1f0] sm:$0xff]
    %v1622 = vld [vmem:[%s7 + $0x1f8] sm:$0xff]
    %v1623 = vld [vmem:[%s8] sm:$0x1]
    %v1625 = vperm.slane %v1623, 0
    %1627 = vmatpush.msra.mxu0 %v1574
    %1628 = vmatpush.msra.mxu0 %v1573
    %1629 = vmatpush.msra.mxu0 %v1572
    %1630 = vmatpush.msra.mxu0 %v1571
    %1631 = vmatpush.msra.mxu0 %v1570
    %1632 = vmatpush.msra.mxu0 %v1569
    %1633 = vmatpush.msra.mxu0 %v1568
    %1634 = vmatpush.msra.mxu0 %v1567
    %1635 = vmatpush.msra.mxu0 %v1566
    %1636 = vmatpush.msra.mxu0 %v1565
    %1637 = vmatpush.msra.mxu0 %v1564
    %1638 = vmatpush.msra.mxu0 %v1563
    %1639 = vmatpush.msra.mxu0 %v1562
    %1640 = vmatpush.msra.mxu0 %v1561
    %1641 = vmatpush.msra.mxu0 %v1560
    %1642 = vmatpush.msra.mxu0 %v1559
    %1643 = vmatmul.f32.gmra.mxu0 %v1555
    %v1644 = vpop.f32.mrf.mxu0
    %v1645 = vadd.f32 %v1625, %v1644
    %1646 = vdwg.mxu0
    %1647 = vmatpush.msra.mxu0 %v1590
    %1648 = vmatpush.msra.mxu0 %v1589
    %1649 = vmatpush.msra.mxu0 %v1588
    %1650 = vmatpush.msra.mxu0 %v1587
    %1651 = vmatpush.msra.mxu0 %v1586
    %1652 = vmatpush.msra.mxu0 %v1585
    %1653 = vmatpush.msra.mxu0 %v1584
    %1654 = vmatpush.msra.mxu0 %v1583
    %1655 = vmatpush.msra.mxu0 %v1582
    %1656 = vmatpush.msra.mxu0 %v1581
    %1657 = vmatpush.msra.mxu0 %v1580
    %1658 = vmatpush.msra.mxu0 %v1579
    %1659 = vmatpush.msra.mxu0 %v1578
    %1660 = vmatpush.msra.mxu0 %v1577
    %1661 = vmatpush.msra.mxu0 %v1576
    %1662 = vmatpush.msra.mxu0 %v1575
    %1663 = vmatmul.f32.gmra.mxu0 %v1556
    %v1664 = vpop.f32.mrf.mxu0
    %v1665 = vadd.f32 %v1645, %v1664
    %1666 = vdwg.mxu0
    %1667 = vmatpush.msra.mxu0 %v1606
    %1668 = vmatpush.msra.mxu0 %v1605
    %1669 = vmatpush.msra.mxu0 %v1604
    %1670 = vmatpush.msra.mxu0 %v1603
    %1671 = vmatpush.msra.mxu0 %v1602
    %1672 = vmatpush.msra.mxu0 %v1601
    %1673 = vmatpush.msra.mxu0 %v1600
    %1674 = vmatpush.msra.mxu0 %v1599
    %1675 = vmatpush.msra.mxu0 %v1598
    %1676 = vmatpush.msra.mxu0 %v1597
    %1677 = vmatpush.msra.mxu0 %v1596
    %1678 = vmatpush.msra.mxu0 %v1595
    %1679 = vmatpush.msra.mxu0 %v1594
    %1680 = vmatpush.msra.mxu0 %v1593
    %1681 = vmatpush.msra.mxu0 %v1592
    %1682 = vmatpush.msra.mxu0 %v1591
    %1683 = vmatmul.f32.gmra.mxu0 %v1557
    %v1684 = vpop.f32.mrf.mxu0
    %v1685 = vadd.f32 %v1665, %v1684
    %1686 = vdwg.mxu0
    %1687 = vmatpush.msra.mxu0 %v1622
    %1688 = vmatpush.msra.mxu0 %v1621
    %1689 = vmatpush.msra.mxu0 %v1620
    %1690 = vmatpush.msra.mxu0 %v1619
    %1691 = vmatpush.msra.mxu0 %v1618
    %1692 = vmatpush.msra.mxu0 %v1617
    %1693 = vmatpush.msra.mxu0 %v1616
    %1694 = vmatpush.msra.mxu0 %v1615
    %1695 = vmatpush.msra.mxu0 %v1614
    %1696 = vmatpush.msra.mxu0 %v1613
    %1697 = vmatpush.msra.mxu0 %v1612
    %1698 = vmatpush.msra.mxu0 %v1611
    %1699 = vmatpush.msra.mxu0 %v1610
    %1700 = vmatpush.msra.mxu0 %v1609
    %1701 = vmatpush.msra.mxu0 %v1608
    %1702 = vmatpush.msra.mxu0 %v1607
    %1703 = vmatmul.f32.gmra.mxu0 %v1558
    %v1704 = vpop.f32.mrf.mxu0
    %v1705 = vadd.f32 %v1685, %v1704
    %1706 = vdwg.mxu0
    %vm1707 = vcmask 44032
    %v1708 = vsel %vm1707, %v1705, -inf
    %1709 = vmax.xlane.f32.xlu0 %v1708
    %v1710 = vpop.xlane.xlu0 %1709
    %v1711 = vsub.f32 %v1705, %v1710
    %v1712 = vmul.f32 %v1711, 1.442695
    %v1713 = vpow.pop %v1712
    %v1714 = vsel %vm1707, %v1713, 0.0
    %1715 = vadd.xlane.f32.xlu0 %v1714
    %v1716 = vpop.xlane.xlu0 %1715
    %v1717 = vrcp.pop %v1716
    %v1718 = vmul.f32 %v1716, %v1717
    %v1719 = vsub.f32 1.0, %v1718
    %v1720 = vmul.f32 %v1717, %v1719
    %v1721 = vadd.f32 %v1717, %v1720
    %vm1722 = vweird.f32 %v1716
    %vm1723 = vweird.f32 %v1717
    %vm1724 = vmor %vm1722, %vm1723
    %v1725 = vsel %vm1724, %v1717, %v1721
    %v1726 = vand.u32 2147483647, %v1716
    %vm1727 = vcmp.eq.f32.partialorder %v1726, 8.507059e+37
    %v1728 = vand.u32 %v1716, 2147483648
    %v1729 = vor.u32 1.1754944e-38, %v1728
    %v1730 = vsel %vm1727, %v1729, %v1725
    %v1731 = vmul.f32 %v1713, %v1730
    %1732 = vst.msk [vmem:[#allocation2] sm:$0xf] %vm1707, %v1731
    %1734 = vrot.lane.b32.xlu0 %v1705, 122
    %v1735 = vpop.permute.xlu0 %1734
    %vm1737 = vcmask 3072
    %1738 = vst.msk [vmem:[%s10] sm:$0xf] %vm1737, %v1735
    // Predicated region
    $region38: #{race_ff_forward.1} parent=1 // pred_check
      _
    $region39: #{race_ff_forward.1} parent=1 // pred_check_branch
      %1740 = sbr.rel (0) target = $region41
    $region40: #{race_ff_forward.1} parent=1 // pred_region
      %1742 = vsyncadd [#allocation3], 0
      %s1744 = sshll.u32 [#allocation2], 4
      %s1745 = int_to_ptr.vmem [resolvable:$true] %s1744
      %s1746 = sshll.u32 %s9, 4
      %s1747 = int_to_ptr.hbm [resolvable:$true] %s1746
      %1749 = dma.vmem_to_hbm [thread:$0]  %s1745, 64, %s1747, [#allocation3]
    $region41: #{race_ff_forward.1} parent=1 // pred_fallthru
      _
    // Predicated region
    $region42: #{race_ff_forward.1} parent=1 // pred_check
      _
    $region43: #{race_ff_forward.1} parent=1 // pred_check_branch
      %1751 = sbr.rel (0) target = $region45
    $region44: #{race_ff_forward.1} parent=1 // pred_region
      _
    $region45: #{race_ff_forward.1} parent=1 // pred_fallthru
      _
    // Predicated region
    $region46: #{race_ff_forward.1} parent=1 // pred_check
      _
    $region47: #{race_ff_forward.1} parent=1 // pred_check_branch
      %1753 = sbr.rel (0) target = $region49
    $region48: #{race_ff_forward.1} parent=1 // pred_region
      %1755 = dma.done [#allocation3], 64
    $region49: #{race_ff_forward.1} parent=1 // pred_fallthru
      _
    // Predicated region
    $region50: #{race_ff_forward.1} parent=1 // pred_check
      _
    $region51: #{race_ff_forward.1} parent=1 // pred_check_branch
      %1757 = sbr.rel (0) target = $region53
    $region52: #{race_ff_forward.1} parent=1 // pred_region
      _
    $region53: #{race_ff_forward.1} parent=1 // pred_fallthru
      _
    %1758 = vsyncpa [#allocation3], 1

</llo_original>
